<compile_context>
chip_gen: v7x
topology: tpu7x:2x2x1
jax: 0.10.0
libtpu: 0.0.40
codegen_flags: <defaults>
</compile_context>

<pallas_src>
import math
import functools

import jax
import jax.numpy as jnp
import numpy as np
from jax.experimental import pallas as pl
from jax.experimental.pallas import tpu as pltpu


# ----------------------------- in-kernel helpers -----------------------------

def _layernorm_tf(x, w, b, eps=1e-12):
    # TF-style LayerNorm (epsilon inside the sqrt), matches the custom LayerNorm.
    u = jnp.mean(x, axis=-1, keepdims=True)
    s = jnp.mean((x - u) ** 2, axis=-1, keepdims=True)
    return w * ((x - u) / jnp.sqrt(s + eps)) + b


def _gelu_erf(x):
    # exact (erf-based) gelu, as in ACT2FN['gelu']
    return x * 0.5 * (1.0 + jax.lax.erf(x / math.sqrt(2.0)))


# --------------------------------- kernel ------------------------------------

def encoder_kernel(x_ref, mask_ref,
                   wqkv_ref, bqkv_ref, wo_ref, bo_ref, ln1w_ref, ln1b_ref,
                   w1_ref, b1_ref, w2_ref, b2_ref, ln2w_ref, ln2b_ref,
                   out_ref, h_ref, *, num_heads, num_layers, output_all):
    """One grid step == (one batch element, one encoder Layer).

    grid = (B, L).  The running activation for batch element `b` is carried
    across the layer axis in the VMEM scratch `h_ref` (S, D).
    """
    S, D = h_ref.shape
    dh = D // num_heads
    layer = pl.program_id(1)

    # Initialize the resident activation from the encoder input at layer 0.
    @pl.when(layer == 0)
    def _():
        h_ref[...] = x_ref[...]

    x = h_ref[...]                                  # (S, D) f32
    mask = mask_ref[...]                            # (S, S) additive mask

    # ---------------- SelfAttention ----------------
    # Fused QKV projection: bf16 operands, f32 accumulation on the MXU.
    # 1/sqrt(dh) is already folded into the Q columns of wqkv/bqkv.
    qkv = jnp.dot(x.astype(jnp.bfloat16), wqkv_ref[...],
                  preferred_element_type=jnp.float32) + bqkv_ref[...]   # (S, 3D)

    def to_heads(m):                                 # (S, D) -> (H, S, dh)
        return jnp.swapaxes(m.reshape(S, num_heads, dh), 0, 1)

    q = to_heads(qkv[:, :D]).astype(jnp.bfloat16)
    k = to_heads(qkv[:, D:2 * D]).astype(jnp.bfloat16)
    v = to_heads(qkv[:, 2 * D:]).astype(jnp.bfloat16)

    # One batched matmul over all heads (batch dim = H).
    scores = jnp.einsum('hqd,hkd->hqk', q, k,
                        preferred_element_type=jnp.float32) + mask      # (H,S,S)
    m_ = jnp.max(scores, axis=-1, keepdims=True)
    e = jnp.exp(scores - m_)
    probs = e * pl.reciprocal(jnp.sum(e, axis=-1, keepdims=True), approx=True)

    ctx = jnp.einsum('hqk,hkd->hqd', probs.astype(jnp.bfloat16), v,
                     preferred_element_type=jnp.float32)                 # (H,S,dh)
    ctx = jnp.swapaxes(ctx, 0, 1).reshape(S, D)                          # (S, D)

    attn = jnp.dot(ctx.astype(jnp.bfloat16), wo_ref[...],
                   preferred_element_type=jnp.float32) + bo_ref[...]
    h1 = _layernorm_tf(attn + x, ln1w_ref[...], ln1b_ref[...])

    # ---------------- Intermediate (FFN) ----------------
    inter = _gelu_erf(jnp.dot(h1.astype(jnp.bfloat16), w1_ref[...],
                              preferred_element_type=jnp.float32) + b1_ref[...])
    ff = jnp.dot(inter.astype(jnp.bfloat16), w2_ref[...],
                 preferred_element_type=jnp.float32) + b2_ref[...]
    out = _layernorm_tf(ff + h1, ln2w_ref[...], ln2b_ref[...])

    h_ref[...] = out                                 # carry to next layer

    if output_all:
        out_ref[...] = out                           # per-layer output
    else:
        @pl.when(layer == num_layers - 1)
        def _():
            out_ref[...] = out                       # only final layer written


# -------------------------------- wrapper ------------------------------------

@functools.lru_cache(maxsize=None)
def make_encoder_call(num_layers, B, S, D, num_heads, output_all):
    single = pl.Buffered(1)          # constant blocks: fetched once, single-buffered

    def cmap2(b, l): return (0, 0)
    def cmap3(b, l): return (0, 0, 0)

    in_specs = [
        pl.BlockSpec((None, S, D), lambda b, l: (b, 0, 0)),              # x (B,S,D)
        pl.BlockSpec((None, S, S), cmap3, pipeline_mode=single),         # mask (1,S,S)
        pl.BlockSpec((D, 3 * D), cmap2, pipeline_mode=single),           # Wqkv (bf16)
        pl.BlockSpec((1, 3 * D), cmap2, pipeline_mode=single),           # bqkv
        pl.BlockSpec((D, D), cmap2, pipeline_mode=single),               # Wo (bf16)
        pl.BlockSpec((1, D), cmap2, pipeline_mode=single),               # bo
        pl.BlockSpec((1, D), cmap2, pipeline_mode=single),               # LN1 w
        pl.BlockSpec((1, D), cmap2, pipeline_mode=single),               # LN1 b
        pl.BlockSpec((D, 4 * D), cmap2, pipeline_mode=single),           # W1 (bf16)
        pl.BlockSpec((1, 4 * D), cmap2, pipeline_mode=single),           # b1
        pl.BlockSpec((4 * D, D), cmap2, pipeline_mode=single),           # W2 (bf16)
        pl.BlockSpec((1, D), cmap2, pipeline_mode=single),               # b2
        pl.BlockSpec((1, D), cmap2, pipeline_mode=single),               # LN2 w
        pl.BlockSpec((1, D), cmap2, pipeline_mode=single),               # LN2 b
    ]

    L_out = num_layers if output_all else 1
    if output_all:
        out_map = lambda b, l: (l, b, 0, 0)
    else:
        out_map = lambda b, l: (0, b, 0, 0)       # resident; written back once per b
    out_spec = pl.BlockSpec((None, None, S, D), out_map)

    # Explicit VMEM budget (bf16 weights single-buffered, f32 everything else),
    # with 2x headroom, clamped to [32 MiB, 64 MiB] so it is valid on v7x too.
    weights_b = 2 * (D * 3 * D + D * D + D * 4 * D + 4 * D * D)
    small_b = 4 * (3 * D + 5 * D + 8 * D + S * S)
    act_b = 4 * (S * D) * 5                                  # scratch + 2x dbuf x/out
    transient_b = 4 * (S * 3 * D + 2 * num_heads * S * S + S * 4 * D + 6 * S * D)
    vmem_limit = int(min(64 << 20,
                         max(32 << 20, 2 * (weights_b + small_b + act_b + transient_b))))

    call = pl.pallas_call(
        functools.partial(encoder_kernel, num_heads=num_heads,
                          num_layers=num_layers, output_all=output_all),
        out_shape=jax.ShapeDtypeStruct((L_out, B, S, D), jnp.float32),
        grid=(B, num_layers),
        in_specs=in_specs,
        out_specs=out_spec,
        scratch_shapes=[pltpu.VMEM((S, D), jnp.float32)],
        compiler_params=pltpu.CompilerParams(
            dimension_semantics=("parallel", "arbitrary"),
            vmem_limit_bytes=vmem_limit),
    )
    return jax.jit(call)


def encoder_forward(x, mask, params, num_layers, num_heads,
                    output_all_encoded_layers=True):
    """Mirrors Encoder.forward (SASRec): stacked identical Layers.

    x: (B, S, D) f32; mask: (1, S, S) additive attention mask shared over batch.
    Returns a list of per-layer outputs (or only the last one).
    """
    B, S, D = x.shape
    (wq, bq, wk, bk, wv, bv, wo, bo, ln1w, ln1b,
     w1, b1, w2, b2, ln2w, ln2b) = params
    dh = D // num_heads
    scale = 1.0 / math.sqrt(dh)

    # Fuse Q/K/V and fold 1/sqrt(dh) into the Q slice; weights in bf16 (MXU),
    # biases stay f32 (added after f32 accumulation).
    wqkv = jnp.concatenate([wq * scale, wk, wv], axis=1).astype(jnp.bfloat16)
    bqkv = jnp.concatenate([bq * scale, bk, bv], axis=1).astype(jnp.float32)

    call = make_encoder_call(num_layers, B, S, D, num_heads,
                             bool(output_all_encoded_layers))
    stacked = call(x, mask, wqkv, bqkv,
                   wo.astype(jnp.bfloat16), bo, ln1w, ln1b,
                   w1.astype(jnp.bfloat16), b1,
                   w2.astype(jnp.bfloat16), b2, ln2w, ln2b)

    if output_all_encoded_layers:
        return [stacked[l] for l in range(num_layers)]
    return [stacked[0]]


# ----------------------------- pure-JAX reference -----------------------------

def _ref_layer(x, mask, params, num_heads):
    (wq, bq, wk, bk, wv, bv, wo, bo, ln1w, ln1b, w1, b1, w2, b2, ln2w, ln2b) = params
    B, S, D = x.shape
    dh = D // num_heads

    def ln(v, w, b, eps=1e-12):
        u = v.mean(-1, keepdims=True)
        s = ((v - u) ** 2).mean(-1, keepdims=True)
        return w[0] * ((v - u) / jnp.sqrt(s + eps)) + b[0]

    q = (x @ wq + bq[0]).reshape(B, S, num_heads, dh).transpose(0, 2, 1, 3)
    k = (x @ wk + bk[0]).reshape(B, S, num_heads, dh).transpose(0, 2, 1, 3)
    v = (x @ wv + bv[0]).reshape(B, S, num_heads, dh).transpose(0, 2, 1, 3)
    scores = jnp.einsum('bhqd,bhkd->bhqk', q, k) / math.sqrt(dh) + mask[:, None]
    probs = jax.nn.softmax(scores, axis=-1)
    ctx = jnp.einsum('bhqk,bhkd->bhqd', probs, v).transpose(0, 2, 1, 3).reshape(B, S, D)
    h1 = ln(ctx @ wo + bo[0] + x, ln1w, ln1b)
    inter = jax.nn.gelu(h1 @ w1 + b1[0], approximate=False)
    return ln(inter @ w2 + b2[0] + h1, ln2w, ln2b)


# ---------------------------------- main --------------------------------------

if __name__ == "__main__":
    B, S, D = 2, 8, 32          # batch, max_seq_length, hidden_size
    num_heads = 2
    num_layers = 2              # args.num_hidden_layers

    key = jax.random.PRNGKey(0)
    ks = jax.random.split(key, 16)
    std = 0.02
    f32 = jnp.float32

    # Linear weights stored already transposed to (in, out); biases as (1, out).
    params = (
        jax.random.normal(ks[0], (D, D), f32) * std,
        jax.random.normal(ks[1], (1, D), f32) * std,          # query W, b
        jax.random.normal(ks[2], (D, D), f32) * std,
        jax.random.normal(ks[3], (1, D), f32) * std,          # key W, b
        jax.random.normal(ks[4], (D, D), f32) * std,
        jax.random.normal(ks[5], (1, D), f32) * std,          # value W, b
        jax.random.normal(ks[6], (D, D), f32) * std,
        jax.random.normal(ks[7], (1, D), f32) * std,          # attn dense W, b
        jnp.ones((1, D), f32), jnp.zeros((1, D), f32),        # LayerNorm 1
        jax.random.normal(ks[8], (D, 4 * D), f32) * std,
        jax.random.normal(ks[9], (1, 4 * D), f32) * std,      # dense_1 W, b
        jax.random.normal(ks[10], (4 * D, D), f32) * std,
        jax.random.normal(ks[11], (1, D), f32) * std,         # dense_2 W, b
        jnp.ones((1, D), f32), jnp.zeros((1, D), f32),        # LayerNorm 2
    )
    # copy.deepcopy in Encoder.__init__ => every layer has identical parameters,
    # so the same tuple is reused for all layers.

    x = jax.random.normal(ks[12], (B, S, D), f32)
    # causal additive attention mask, BERT/SASRec style (0 keep, -10000 masked),
    # shared over batch -> passed as (1, S, S) (no (B,S,S) materialization).
    causal = jnp.tril(jnp.ones((S, S), f32))
    mask = ((1.0 - causal) * -10000.0)[None]                  # (1, S, S)

    outs = encoder_forward(x, mask, params, num_layers, num_heads,
                           output_all_encoded_layers=True)
    outs = [jax.block_until_ready(o) for o in outs]

    # correctness vs pure-JAX f32 reference of the same Encoder
    # (kernel uses bf16 MXU operands with f32 accumulation -> 5e-3 tolerance)
    h_ref = x
    for i in range(num_layers):
        h_ref = _ref_layer(h_ref, mask, params, num_heads)
        np.testing.assert_allclose(np.asarray(outs[i]), np.asarray(h_ref),
                                   rtol=5e-3, atol=5e-3)

    # output_all_encoded_layers=False path (only last layer written to HBM)
    last = encoder_forward(x, mask, params, num_layers, num_heads,
                           output_all_encoded_layers=False)[0]
    last = jax.block_until_ready(last)
    np.testing.assert_allclose(np.asarray(last), np.asarray(h_ref),
                               rtol=5e-3, atol=5e-3)

    print("KERNEL_OK")
</pallas_src>

<mosaic_0001>
module attributes {stable_mosaic.version = 11 : i64} {
  func.func @encoder_kernel(%arg0: i32, %arg1: i32, %arg2: memref<1x8x32xf32, #tpu.memory_space<vmem>>, %arg3: memref<1x8x8xf32, #tpu.memory_space<vmem>>, %arg4: memref<32x96xbf16, #tpu.memory_space<vmem>>, %arg5: memref<1x96xf32, #tpu.memory_space<vmem>>, %arg6: memref<32x32xbf16, #tpu.memory_space<vmem>>, %arg7: memref<1x32xf32, #tpu.memory_space<vmem>>, %arg8: memref<1x32xf32, #tpu.memory_space<vmem>>, %arg9: memref<1x32xf32, #tpu.memory_space<vmem>>, %arg10: memref<32x128xbf16, #tpu.memory_space<vmem>>, %arg11: memref<1x128xf32, #tpu.memory_space<vmem>>, %arg12: memref<128x32xbf16, #tpu.memory_space<vmem>>, %arg13: memref<1x32xf32, #tpu.memory_space<vmem>>, %arg14: memref<1x32xf32, #tpu.memory_space<vmem>>, %arg15: memref<1x32xf32, #tpu.memory_space<vmem>>, %arg16: memref<1x1x8x32xf32, #tpu.memory_space<vmem>>, %arg17: memref<8x32xf32, #tpu.memory_space<vmem>>) attributes {dimension_semantics = [#tpu.dimension_semantics<parallel>, #tpu.dimension_semantics<arbitrary>], iteration_bounds = array<i64: 2, 2>, scalar_prefetch = 0 : i64, scratch_operands = 1 : i64, tpu.core_type = #tpu.core_type<tc>, window_params = [{transform_indices = @transform_0, window_bounds = array<i64: 1, 8, 32>}, {pipeline_mode = #tpu.pipeline_mode<synchronous>, transform_indices = @transform_1, window_bounds = array<i64: 1, 8, 8>}, {pipeline_mode = #tpu.pipeline_mode<synchronous>, transform_indices = @transform_2, window_bounds = array<i64: 32, 96>}, {pipeline_mode = #tpu.pipeline_mode<synchronous>, transform_indices = @transform_3, window_bounds = array<i64: 1, 96>}, {pipeline_mode = #tpu.pipeline_mode<synchronous>, transform_indices = @transform_4, window_bounds = array<i64: 32, 32>}, {pipeline_mode = #tpu.pipeline_mode<synchronous>, transform_indices = @transform_5, window_bounds = array<i64: 1, 32>}, {pipeline_mode = #tpu.pipeline_mode<synchronous>, transform_indices = @transform_6, window_bounds = array<i64: 1, 32>}, {pipeline_mode = #tpu.pipeline_mode<synchronous>, transform_indices = @transform_7, window_bounds = array<i64: 1, 32>}, {pipeline_mode = #tpu.pipeline_mode<synchronous>, transform_indices = @transform_8, window_bounds = array<i64: 32, 128>}, {pipeline_mode = #tpu.pipeline_mode<synchronous>, transform_indices = @transform_9, window_bounds = array<i64: 1, 128>}, {pipeline_mode = #tpu.pipeline_mode<synchronous>, transform_indices = @transform_10, window_bounds = array<i64: 128, 32>}, {pipeline_mode = #tpu.pipeline_mode<synchronous>, transform_indices = @transform_11, window_bounds = array<i64: 1, 32>}, {pipeline_mode = #tpu.pipeline_mode<synchronous>, transform_indices = @transform_12, window_bounds = array<i64: 1, 32>}, {pipeline_mode = #tpu.pipeline_mode<synchronous>, transform_indices = @transform_13, window_bounds = array<i64: 1, 32>}, {transform_indices = @transform_14, window_bounds = array<i64: 1, 1, 8, 32>}]} {
    %c0_i32 = arith.constant 0 : i32
    %0 = arith.cmpi eq, %arg1, %c0_i32 : i32
    %1 = arith.extui %0 : i1 to i32
    %c0_i32_0 = arith.constant 0 : i32
    %2 = arith.cmpi ne, %1, %c0_i32_0 : i32
    scf.if %2 {
      %c0_55 = arith.constant 0 : index
      %c0_56 = arith.constant 0 : index
      %c0_57 = arith.constant 0 : index
      %122 = vector.load %arg2[%c0_55, %c0_56, %c0_57] : memref<1x8x32xf32, #tpu.memory_space<vmem>>, vector<1x8x32xf32>
      %123 = vector.shape_cast %122 : vector<1x8x32xf32> to vector<8x32xf32>
      %c0_58 = arith.constant 0 : index
      %c0_59 = arith.constant 0 : index
      %124 = vector.load %arg17[%c0_58, %c0_59] : memref<8x32xf32, #tpu.memory_space<vmem>>, vector<8x32xf32>
      tpu.vector_store %arg17[%c0_58, %c0_59], %123 {strides = array<i32>} : memref<8x32xf32, #tpu.memory_space<vmem>>, vector<8x32xf32>,
    } else {
    }
    %c0 = arith.constant 0 : index
    %c0_1 = arith.constant 0 : index
    %3 = vector.load %arg17[%c0, %c0_1] : memref<8x32xf32, #tpu.memory_space<vmem>>, vector<8x32xf32>
    %c0_2 = arith.constant 0 : index
    %c0_3 = arith.constant 0 : index
    %c0_4 = arith.constant 0 : index
    %4 = vector.load %arg3[%c0_2, %c0_3, %c0_4] : memref<1x8x8xf32, #tpu.memory_space<vmem>>, vector<1x8x8xf32>
    %5 = vector.shape_cast %4 : vector<1x8x8xf32> to vector<8x8xf32>
    %6 = arith.truncf %3 : vector<8x32xf32> to vector<8x32xbf16>
    %c0_5 = arith.constant 0 : index
    %c0_6 = arith.constant 0 : index
    %7 = vector.load %arg4[%c0_5, %c0_6] : memref<32x96xbf16, #tpu.memory_space<vmem>>, vector<32x96xbf16>
    %cst = arith.constant dense<0.000000e+00> : vector<8x96xf32>
    %8 = tpu.matmul %6, %7, %cst {dimension_numbers = #tpu.dot_dimension_numbers<[1], [0], [0], [1], [0, 0, 1, 1], [], []>} : vector<8x32xbf16>, vector<32x96xbf16>, vector<8x96xf32> -> vector<8x96xf32>
    %c0_7 = arith.constant 0 : index
    %c0_8 = arith.constant 0 : index
    %9 = vector.load %arg5[%c0_7, %c0_8] : memref<1x96xf32, #tpu.memory_space<vmem>>, vector<1x96xf32>
    %10 = vector.broadcast %9 : vector<1x96xf32> to vector<8x96xf32>
    %11 = arith.addf %8, %10 : vector<8x96xf32>
    %12 = vector.extract_strided_slice %11 {offsets = [0, 0], sizes = [8, 32], strides = [1, 1]} : vector<8x96xf32> to vector<8x32xf32>
    %13 = vector.shape_cast %12 : vector<8x32xf32> to vector<8x2x16xf32>
    %14 = tpu.transpose %13, [1, 0, 2] : vector<8x2x16xf32> -> vector<2x8x16xf32>
    %15 = arith.truncf %14 : vector<2x8x16xf32> to vector<2x8x16xbf16>
    %16 = vector.extract_strided_slice %11 {offsets = [0, 32], sizes = [8, 32], strides = [1, 1]} : vector<8x96xf32> to vector<8x32xf32>
    %17 = vector.shape_cast %16 : vector<8x32xf32> to vector<8x2x16xf32>
    %18 = tpu.transpose %17, [1, 0, 2] : vector<8x2x16xf32> -> vector<2x8x16xf32>
    %19 = arith.truncf %18 : vector<2x8x16xf32> to vector<2x8x16xbf16>
    %20 = vector.extract_strided_slice %11 {offsets = [0, 64], sizes = [8, 32], strides = [1, 1]} : vector<8x96xf32> to vector<8x32xf32>
    %21 = vector.shape_cast %20 : vector<8x32xf32> to vector<8x2x16xf32>
    %22 = tpu.transpose %21, [1, 0, 2] : vector<8x2x16xf32> -> vector<2x8x16xf32>
    %23 = arith.truncf %22 : vector<2x8x16xf32> to vector<2x8x16xbf16>
    "tpu.trace_start"() <{level = 10 : i32, message = "hqd,hkd->hqk"}> : () -> ()
    %cst_9 = arith.constant dense<0.000000e+00> : vector<2x8x8xf32>
    %24 = tpu.matmul %15, %19, %cst_9 {dimension_numbers = #tpu.dot_dimension_numbers<[2], [2], [1], [1], [0, 0, 0, 1, 1, 1], [0], [0]>} : vector<2x8x16xbf16>, vector<2x8x16xbf16>, vector<2x8x8xf32> -> vector<2x8x8xf32>
    "tpu.trace_stop"() : () -> ()
    %25 = vector.shape_cast %5 : vector<8x8xf32> to vector<1x8x8xf32>
    %26 = vector.broadcast %25 : vector<1x8x8xf32> to vector<2x8x8xf32>
    %27 = arith.addf %24, %26 : vector<2x8x8xf32>
    %cst_10 = arith.constant dense<0xFF800000> : vector<2x8xf32>
    %28 = vector.multi_reduction <maximumf>, %27, %cst_10 [2] : vector<2x8x8xf32> to vector<2x8xf32>
    %29 = vector.shape_cast %28 : vector<2x8xf32> to vector<2x8x1xf32>
    %30 = vector.broadcast %29 : vector<2x8x1xf32> to vector<2x8x8xf32>
    %31 = arith.subf %27, %30 : vector<2x8x8xf32>
    %32 = math.exp %31 : vector<2x8x8xf32>
    %cst_11 = arith.constant dense<0.000000e+00> : vector<2x8xf32>
    %33 = vector.multi_reduction <add>, %32, %cst_11 [2] : vector<2x8x8xf32> to vector<2x8xf32>
    %34 = vector.shape_cast %33 : vector<2x8xf32> to vector<2x8x1xf32>
    %35 = tpu.reciprocal %34 {approx = true} : vector<2x8x1xf32> -> vector<2x8x1xf32>
    %36 = vector.broadcast %35 : vector<2x8x1xf32> to vector<2x8x8xf32>
    %37 = arith.mulf %32, %36 : vector<2x8x8xf32>
    %38 = arith.truncf %37 : vector<2x8x8xf32> to vector<2x8x8xbf16>
    "tpu.trace_start"() <{level = 10 : i32, message = "hqk,hkd->hqd"}> : () -> ()
    %cst_12 = arith.constant dense<0.000000e+00> : vector<2x8x16xf32>
    %39 = tpu.matmul %38, %23, %cst_12 {dimension_numbers = #tpu.dot_dimension_numbers<[2], [1], [1], [2], [0, 0, 0, 1, 1, 2], [0], [0]>} : vector<2x8x8xbf16>, vector<2x8x16xbf16>, vector<2x8x16xf32> -> vector<2x8x16xf32>
    "tpu.trace_stop"() : () -> ()
    %40 = tpu.transpose %39, [1, 0, 2] : vector<2x8x16xf32> -> vector<8x2x16xf32>
    %41 = vector.shape_cast %40 : vector<8x2x16xf32> to vector<8x32xf32>
    %42 = arith.truncf %41 : vector<8x32xf32> to vector<8x32xbf16>
    %c0_13 = arith.constant 0 : index
    %c0_14 = arith.constant 0 : index
    %43 = vector.load %arg6[%c0_13, %c0_14] : memref<32x32xbf16, #tpu.memory_space<vmem>>, vector<32x32xbf16>
    %cst_15 = arith.constant dense<0.000000e+00> : vector<8x32xf32>
    %44 = tpu.matmul %42, %43, %cst_15 {dimension_numbers = #tpu.dot_dimension_numbers<[1], [0], [0], [1], [0, 0, 1, 1], [], []>} : vector<8x32xbf16>, vector<32x32xbf16>, vector<8x32xf32> -> vector<8x32xf32>
    %c0_16 = arith.constant 0 : index
    %c0_17 = arith.constant 0 : index
    %45 = vector.load %arg7[%c0_16, %c0_17] : memref<1x32xf32, #tpu.memory_space<vmem>>, vector<1x32xf32>
    %46 = vector.broadcast %45 : vector<1x32xf32> to vector<8x32xf32>
    %47 = arith.addf %44, %46 : vector<8x32xf32>
    %48 = arith.addf %47, %3 : vector<8x32xf32>
    %c0_18 = arith.constant 0 : index
    %c0_19 = arith.constant 0 : index
    %49 = vector.load %arg8[%c0_18, %c0_19] : memref<1x32xf32, #tpu.memory_space<vmem>>, vector<1x32xf32>
    %c0_20 = arith.constant 0 : index
    %c0_21 = arith.constant 0 : index
    %50 = vector.load %arg9[%c0_20, %c0_21] : memref<1x32xf32, #tpu.memory_space<vmem>>, vector<1x32xf32>
    %cst_22 = arith.constant dense<0.000000e+00> : vector<8xf32>
    %51 = vector.multi_reduction <add>, %48, %cst_22 [1] : vector<8x32xf32> to vector<8xf32>
    %52 = vector.shape_cast %51 : vector<8xf32> to vector<8x1xf32>
    %cst_23 = arith.constant 3.200000e+01 : f32
    %53 = vector.broadcast %cst_23 : f32 to vector<8x1xf32>
    %54 = arith.divf %52, %53 : vector<8x1xf32>
    %55 = vector.broadcast %54 : vector<8x1xf32> to vector<8x32xf32>
    %56 = arith.subf %48, %55 : vector<8x32xf32>
    %57 = arith.mulf %56, %56 : vector<8x32xf32>
    %cst_24 = arith.constant dense<0.000000e+00> : vector<8xf32>
    %58 = vector.multi_reduction <add>, %57, %cst_24 [1] : vector<8x32xf32> to vector<8xf32>
    %59 = vector.shape_cast %58 : vector<8xf32> to vector<8x1xf32>
    %cst_25 = arith.constant 3.200000e+01 : f32
    %60 = vector.broadcast %cst_25 : f32 to vector<8x1xf32>
    %61 = arith.divf %59, %60 : vector<8x1xf32>
    %62 = vector.broadcast %54 : vector<8x1xf32> to vector<8x32xf32>
    %63 = arith.subf %48, %62 : vector<8x32xf32>
    %cst_26 = arith.constant 9.99999996E-13 : f32
    %64 = vector.broadcast %cst_26 : f32 to vector<8x1xf32>
    %65 = arith.addf %61, %64 : vector<8x1xf32>
    %66 = math.sqrt %65 : vector<8x1xf32>
    %67 = vector.broadcast %66 : vector<8x1xf32> to vector<8x32xf32>
    %68 = arith.divf %63, %67 : vector<8x32xf32>
    %69 = vector.broadcast %49 : vector<1x32xf32> to vector<8x32xf32>
    %70 = arith.mulf %69, %68 : vector<8x32xf32>
    %71 = vector.broadcast %50 : vector<1x32xf32> to vector<8x32xf32>
    %72 = arith.addf %70, %71 : vector<8x32xf32>
    %73 = arith.truncf %72 : vector<8x32xf32> to vector<8x32xbf16>
    %c0_27 = arith.constant 0 : index
    %c0_28 = arith.constant 0 : index
    %74 = vector.load %arg10[%c0_27, %c0_28] : memref<32x128xbf16, #tpu.memory_space<vmem>>, vector<32x128xbf16>
    %cst_29 = arith.constant dense<0.000000e+00> : vector<8x128xf32>
    %75 = tpu.matmul %73, %74, %cst_29 {dimension_numbers = #tpu.dot_dimension_numbers<[1], [0], [0], [1], [0, 0, 1, 1], [], []>} : vector<8x32xbf16>, vector<32x128xbf16>, vector<8x128xf32> -> vector<8x128xf32>
    %c0_30 = arith.constant 0 : index
    %c0_31 = arith.constant 0 : index
    %76 = vector.load %arg11[%c0_30, %c0_31] : memref<1x128xf32, #tpu.memory_space<vmem>>, vector<1x128xf32>
    %77 = vector.broadcast %76 : vector<1x128xf32> to vector<8x128xf32>
    %78 = arith.addf %75, %77 : vector<8x128xf32>
    %cst_32 = arith.constant 5.000000e-01 : f32
    %79 = vector.broadcast %cst_32 : f32 to vector<8x128xf32>
    %80 = arith.mulf %78, %79 : vector<8x128xf32>
    %cst_33 = arith.constant 1.41421354 : f32
    %81 = vector.broadcast %cst_33 : f32 to vector<8x128xf32>
    %82 = arith.divf %78, %81 : vector<8x128xf32>
    %83 = math.erf %82 : vector<8x128xf32>
    %cst_34 = arith.constant 1.000000e+00 : f32
    %84 = vector.broadcast %cst_34 : f32 to vector<8x128xf32>
    %85 = arith.addf %84, %83 : vector<8x128xf32>
    %86 = arith.mulf %80, %85 : vector<8x128xf32>
    %87 = arith.truncf %86 : vector<8x128xf32> to vector<8x128xbf16>
    %c0_35 = arith.constant 0 : index
    %c0_36 = arith.constant 0 : index
    %88 = vector.load %arg12[%c0_35, %c0_36] : memref<128x32xbf16, #tpu.memory_space<vmem>>, vector<128x32xbf16>
    %cst_37 = arith.constant dense<0.000000e+00> : vector<8x32xf32>
    %89 = tpu.matmul %87, %88, %cst_37 {dimension_numbers = #tpu.dot_dimension_numbers<[1], [0], [0], [1], [0, 0, 1, 1], [], []>} : vector<8x128xbf16>, vector<128x32xbf16>, vector<8x32xf32> -> vector<8x32xf32>
    %c0_38 = arith.constant 0 : index
    %c0_39 = arith.constant 0 : index
    %90 = vector.load %arg13[%c0_38, %c0_39] : memref<1x32xf32, #tpu.memory_space<vmem>>, vector<1x32xf32>
    %91 = vector.broadcast %90 : vector<1x32xf32> to vector<8x32xf32>
    %92 = arith.addf %89, %91 : vector<8x32xf32>
    %93 = arith.addf %92, %72 : vector<8x32xf32>
    %c0_40 = arith.constant 0 : index
    %c0_41 = arith.constant 0 : index
    %94 = vector.load %arg14[%c0_40, %c0_41] : memref<1x32xf32, #tpu.memory_space<vmem>>, vector<1x32xf32>
    %c0_42 = arith.constant 0 : index
    %c0_43 = arith.constant 0 : index
    %95 = vector.load %arg15[%c0_42, %c0_43] : memref<1x32xf32, #tpu.memory_space<vmem>>, vector<1x32xf32>
    %cst_44 = arith.constant dense<0.000000e+00> : vector<8xf32>
    %96 = vector.multi_reduction <add>, %93, %cst_44 [1] : vector<8x32xf32> to vector<8xf32>
    %97 = vector.shape_cast %96 : vector<8xf32> to vector<8x1xf32>
    %cst_45 = arith.constant 3.200000e+01 : f32
    %98 = vector.broadcast %cst_45 : f32 to vector<8x1xf32>
    %99 = arith.divf %97, %98 : vector<8x1xf32>
    %100 = vector.broadcast %99 : vector<8x1xf32> to vector<8x32xf32>
    %101 = arith.subf %93, %100 : vector<8x32xf32>
    %102 = arith.mulf %101, %101 : vector<8x32xf32>
    %cst_46 = arith.constant dense<0.000000e+00> : vector<8xf32>
    %103 = vector.multi_reduction <add>, %102, %cst_46 [1] : vector<8x32xf32> to vector<8xf32>
    %104 = vector.shape_cast %103 : vector<8xf32> to vector<8x1xf32>
    %cst_47 = arith.constant 3.200000e+01 : f32
    %105 = vector.broadcast %cst_47 : f32 to vector<8x1xf32>
    %106 = arith.divf %104, %105 : vector<8x1xf32>
    %107 = vector.broadcast %99 : vector<8x1xf32> to vector<8x32xf32>
    %108 = arith.subf %93, %107 : vector<8x32xf32>
    %cst_48 = arith.constant 9.99999996E-13 : f32
    %109 = vector.broadcast %cst_48 : f32 to vector<8x1xf32>
    %110 = arith.addf %106, %109 : vector<8x1xf32>
    %111 = math.sqrt %110 : vector<8x1xf32>
    %112 = vector.broadcast %111 : vector<8x1xf32> to vector<8x32xf32>
    %113 = arith.divf %108, %112 : vector<8x32xf32>
    %114 = vector.broadcast %94 : vector<1x32xf32> to vector<8x32xf32>
    %115 = arith.mulf %114, %113 : vector<8x32xf32>
    %116 = vector.broadcast %95 : vector<1x32xf32> to vector<8x32xf32>
    %117 = arith.addf %115, %116 : vector<8x32xf32>
    %c0_49 = arith.constant 0 : index
    %c0_50 = arith.constant 0 : index
    %118 = vector.load %arg17[%c0_49, %c0_50] : memref<8x32xf32, #tpu.memory_space<vmem>>, vector<8x32xf32>
    tpu.vector_store %arg17[%c0_49, %c0_50], %117 {strides = array<i32>} : memref<8x32xf32, #tpu.memory_space<vmem>>, vector<8x32xf32>,
    %c0_51 = arith.constant 0 : index
    %c0_52 = arith.constant 0 : index
    %c0_53 = arith.constant 0 : index
    %c0_54 = arith.constant 0 : index
    %119 = vector.load %arg16[%c0_51, %c0_52, %c0_53, %c0_54] : memref<1x1x8x32xf32, #tpu.memory_space<vmem>>, vector<1x1x8x32xf32>
    %120 = vector.shape_cast %119 : vector<1x1x8x32xf32> to vector<8x32xf32>
    %121 = vector.shape_cast %117 : vector<8x32xf32> to vector<1x1x8x32xf32>
    tpu.vector_store %arg16[%c0_51, %c0_52, %c0_53, %c0_54], %121 {strides = array<i32>} : memref<1x1x8x32xf32, #tpu.memory_space<vmem>>, vector<1x1x8x32xf32>,
    return
  }
  func.func @transform_0(%arg0: i32, %arg1: i32) -> (i32, i32, i32) {
    %c0_i32 = arith.constant 0 : i32
    %c0_i32_0 = arith.constant 0 : i32
    %c0_i32_1 = arith.constant 0 : i32
    return %arg0, %c0_i32, %c0_i32_0 : i32, i32, i32
  }
  func.func @transform_1(%arg0: i32, %arg1: i32) -> (i32, i32, i32) {
    %c0_i32 = arith.constant 0 : i32
    %c0_i32_0 = arith.constant 0 : i32
    %c0_i32_1 = arith.constant 0 : i32
    %c0_i32_2 = arith.constant 0 : i32
    return %c0_i32, %c0_i32_0, %c0_i32_1 : i32, i32, i32
  }
  func.func @transform_2(%arg0: i32, %arg1: i32) -> (i32, i32) {
    %c0_i32 = arith.constant 0 : i32
    %c0_i32_0 = arith.constant 0 : i32
    %c0_i32_1 = arith.constant 0 : i32
    return %c0_i32, %c0_i32_0 : i32, i32
  }
  func.func @transform_3(%arg0: i32, %arg1: i32) -> (i32, i32) {
    %c0_i32 = arith.constant 0 : i32
    %c0_i32_0 = arith.constant 0 : i32
    %c0_i32_1 = arith.constant 0 : i32
    return %c0_i32, %c0_i32_0 : i32, i32
  }
  func.func @transform_4(%arg0: i32, %arg1: i32) -> (i32, i32) {
    %c0_i32 = arith.constant 0 : i32
    %c0_i32_0 = arith.constant 0 : i32
    %c0_i32_1 = arith.constant 0 : i32
    return %c0_i32, %c0_i32_0 : i32, i32
  }
  func.func @transform_5(%arg0: i32, %arg1: i32) -> (i32, i32) {
    %c0_i32 = arith.constant 0 : i32
    %c0_i32_0 = arith.constant 0 : i32
    %c0_i32_1 = arith.constant 0 : i32
    return %c0_i32, %c0_i32_0 : i32, i32
  }
  func.func @transform_6(%arg0: i32, %arg1: i32) -> (i32, i32) {
    %c0_i32 = arith.constant 0 : i32
    %c0_i32_0 = arith.constant 0 : i32
    %c0_i32_1 = arith.constant 0 : i32
    return %c0_i32, %c0_i32_0 : i32, i32
  }
  func.func @transform_7(%arg0: i32, %arg1: i32) -> (i32, i32) {
    %c0_i32 = arith.constant 0 : i32
    %c0_i32_0 = arith.constant 0 : i32
    %c0_i32_1 = arith.constant 0 : i32
    return %c0_i32, %c0_i32_0 : i32, i32
  }
  func.func @transform_8(%arg0: i32, %arg1: i32) -> (i32, i32) {
    %c0_i32 = arith.constant 0 : i32
    %c0_i32_0 = arith.constant 0 : i32
    %c0_i32_1 = arith.constant 0 : i32
    return %c0_i32, %c0_i32_0 : i32, i32
  }
  func.func @transform_9(%arg0: i32, %arg1: i32) -> (i32, i32) {
    %c0_i32 = arith.constant 0 : i32
    %c0_i32_0 = arith.constant 0 : i32
    %c0_i32_1 = arith.constant 0 : i32
    return %c0_i32, %c0_i32_0 : i32, i32
  }
  func.func @transform_10(%arg0: i32, %arg1: i32) -> (i32, i32) {
    %c0_i32 = arith.constant 0 : i32
    %c0_i32_0 = arith.constant 0 : i32
    %c0_i32_1 = arith.constant 0 : i32
    return %c0_i32, %c0_i32_0 : i32, i32
  }
  func.func @transform_11(%arg0: i32, %arg1: i32) -> (i32, i32) {
    %c0_i32 = arith.constant 0 : i32
    %c0_i32_0 = arith.constant 0 : i32
    %c0_i32_1 = arith.constant 0 : i32
    return %c0_i32, %c0_i32_0 : i32, i32
  }
  func.func @transform_12(%arg0: i32, %arg1: i32) -> (i32, i32) {
    %c0_i32 = arith.constant 0 : i32
    %c0_i32_0 = arith.constant 0 : i32
    %c0_i32_1 = arith.constant 0 : i32
    return %c0_i32, %c0_i32_0 : i32, i32
  }
  func.func @transform_13(%arg0: i32, %arg1: i32) -> (i32, i32) {
    %c0_i32 = arith.constant 0 : i32
    %c0_i32_0 = arith.constant 0 : i32
    %c0_i32_1 = arith.constant 0 : i32
    return %c0_i32, %c0_i32_0 : i32, i32
  }
  func.func @transform_14(%arg0: i32, %arg1: i32) -> (i32, i32, i32, i32) {
    %c0_i32 = arith.constant 0 : i32
    %c0_i32_0 = arith.constant 0 : i32
    %c0_i32_1 = arith.constant 0 : i32
    return %arg1, %arg0, %c0_i32, %c0_i32_0 : i32, i32, i32, i32
  }
}

</mosaic_0001>

<llo_original>
// kernel: tpu_custom_call.1
$region0: #{tpu_custom_call.1}
  #allocation0 [shape = 'u32[]', space=smem, size = 0x4, offset = 0x4, fixed_abs, tag = 'smem constant byte address 0x4 - core index']
  #allocation1 [shape = 'u32[144,128]{1,0:T(1,128)}', space=vmem, size = 0x12000, scoped, tag = 'internal scratch']
  #allocation2 [shape = 'f32[8,32]{1,0:T(8,128)}', space=vmem, size = 0x1000, scoped, tag = 'scratch operand']
  %s0 = inlined_call_operand.vmem [shape: f32[2,8,32], index: 0, kind: input, shape index: {}]
  %s1 = inlined_call_operand.vmem [shape: f32[1,8,8], index: 1, kind: input, shape index: {}]
  %s2 = inlined_call_operand.vmem [shape: bf16[32,96], index: 2, kind: input, shape index: {}]
  %s3 = inlined_call_operand.vmem [shape: f32[1,96], index: 3, kind: input, shape index: {}]
  %s4 = inlined_call_operand.vmem [shape: bf16[32,32], index: 4, kind: input, shape index: {}]
  %s5 = inlined_call_operand.vmem [shape: f32[1,32], index: 5, kind: input, shape index: {}]
  %s6 = inlined_call_operand.vmem [shape: f32[1,32], index: 6, kind: input, shape index: {}]
  %s7 = inlined_call_operand.vmem [shape: f32[1,32], index: 7, kind: input, shape index: {}]
  %s8 = inlined_call_operand.vmem [shape: bf16[32,128], index: 8, kind: input, shape index: {}]
  %s9 = inlined_call_operand.vmem [shape: f32[1,128], index: 9, kind: input, shape index: {}]
  %s10 = inlined_call_operand.vmem [shape: bf16[128,32], index: 10, kind: input, shape index: {}]
  %s11 = inlined_call_operand.vmem [shape: f32[1,32], index: 11, kind: input, shape index: {}]
  %s12 = inlined_call_operand.vmem [shape: f32[1,32], index: 12, kind: input, shape index: {}]
  %s13 = inlined_call_operand.vmem [shape: f32[1,32], index: 13, kind: input, shape index: {}]
  %s14 = inlined_call_operand.hbm [shape: f32[2,2,8,32], index: 14, kind: output, shape index: {}]
  %s15 = sld [smem:[#allocation0]]
  $region93: #{tpu_custom_call.1} parent=0
    _
  %s17 = ssub.s32 1, %s15
  %s18 = scalar_select 0, %s17, %s15
  $region1: #{tpu_custom_call.1} parent=0
    #allocation3 [shape = 'u8[8192]{0}', space=vmem, size = 0x2000, scoped, tag = 'output window, operand 0']
    #allocation4 [shape = 's32[2]{0}', space=sflag, size = 0x8, scoped, tag = 'scoped memory for tpu_custom_call.1']
    %19 = vsyncpa [#allocation4], 0
    %s20 = scalar_lea.sflag [#allocation4], 1
    %21 = vsyncpa %s20, 0
    loop: start=0, step=1, limit=6
    $region2: #{tpu_custom_call.1} parent=1 // loop_pre_header
      _
    $region3: #{tpu_custom_call.1} parent=1 // loop_header
      %s23 = sphi 0, %s27
      %p24 = scmp.ge.s32.totalorder %s23, 6
      %s30 = sphi 0, %s42
      %s31 = sphi 0, %s38
      %s32 = sphi 0, %s30
      %s33 = sphi 0, %s31
      %s34 = sphi 0, %s32
      %s35 = sphi 0, %s33
      %s45 = sphi 0, %s47
      %s48 = sphi 0, %s45
      %s49 = sphi 0, %s48
      %s65 = sphi 0, %s49
      %s69 = sphi 0, %s69
      %s71 = sphi 0, %s69
      %s72 = sphi 0, %s71
      %s86 = sphi 0, %s72
      %s90 = sphi 0, %s90
      %s92 = sphi 0, %s90
      %s93 = sphi 0, %s92
      %s107 = sphi 0, %s93
      %s111 = sphi 0, %s111
      %s113 = sphi 0, %s111
      %s114 = sphi 0, %s113
      %s128 = sphi 0, %s114
      %s132 = sphi 0, %s132
      %s134 = sphi 0, %s132
      %s135 = sphi 0, %s134
      %s149 = sphi 0, %s135
      %s153 = sphi 0, %s153
      %s155 = sphi 0, %s153
      %s156 = sphi 0, %s155
      %s170 = sphi 0, %s156
      %s174 = sphi 0, %s174
      %s176 = sphi 0, %s174
      %s177 = sphi 0, %s176
      %s191 = sphi 0, %s177
      %s195 = sphi 0, %s195
      %s197 = sphi 0, %s195
      %s198 = sphi 0, %s197
      %s212 = sphi 0, %s198
      %s216 = sphi 0, %s216
      %s218 = sphi 0, %s216
      %s219 = sphi 0, %s218
      %s233 = sphi 0, %s219
      %s237 = sphi 0, %s237
      %s239 = sphi 0, %s237
      %s240 = sphi 0, %s239
      %s254 = sphi 0, %s240
      %s258 = sphi 0, %s258
      %s260 = sphi 0, %s258
      %s261 = sphi 0, %s260
      %s275 = sphi 0, %s261
      %s279 = sphi 0, %s279
      %s281 = sphi 0, %s279
      %s282 = sphi 0, %s281
      %s296 = sphi 0, %s282
      %s300 = sphi 0, %s300
      %s302 = sphi 0, %s300
      %s303 = sphi 0, %s302
      %s317 = sphi 0, %s303
      %s321 = sphi 0, %s321
      %s323 = sphi 0, %s321
      %s324 = sphi 0, %s323
      %s338 = sphi 0, %s324
      %s346 = sphi 0, %s348
      %s349 = sphi 0, %s346
      %s350 = sphi 0, %s349
      %s366 = sphi 0, %s350
    $region4: #{tpu_custom_call.1} parent=1 // loop_header_branch
      %26 = sbr.rel (%p24) target = $region8
    $region5: #{tpu_custom_call.1} parent=1 // loop_body
      %s28 = ssub.s32 %s23, 1
      %s29 = ssub.s32 %s23, 2
      %s36 = sadd.s32 1, %s31
      %p37 = scmp.ge.s32.totalorder %s36, 2
      %s38 = scalar_select %p37, 0, %s36
      %s39 = sadd.s32 1, %s30
      %s40 = scalar_select %p37, %s39, %s30
      %p41 = scmp.ge.s32.totalorder %s40, 2
      %s42 = scalar_select %p41, 0, %s40
      %s43 = ssub.s32 %s30, %s42
      %p44 = scmp.eq.s32.totalorder %s43, 0
      %s46 = sadd.s32 %s45, 1
      %s47 = scalar_select %p44, %s45, %s46
      %p50 = pneg %p44
      %p51 = scmp.eq.s32.totalorder %s23, 3
      %p52 = por %p50, %p51
      %p53 = scmp.ne.s32.totalorder %s45, %s48
      %p54 = scmp.eq.s32.totalorder %s23, 0
      %p55 = por %p53, %p54
      %p56 = scmp.ne.s32.totalorder %s45, %s48
      %p57 = scmp.eq.s32.totalorder %s28, 3
      %p58 = por %p56, %p57
      %p59 = scmp.ne.s32.totalorder %s48, %s49
      %p60 = scmp.eq.s32.totalorder %s28, 0
      %p61 = por %p59, %p60
      %p62 = scmp.ne.s32.totalorder %s48, %s49
      %p63 = scmp.eq.s32.totalorder %s29, 3
      %p64 = por %p62, %p63
      %p66 = scmp.ne.s32.totalorder %s49, %s65
      %p67 = scmp.eq.s32.totalorder %s29, 0
      %p68 = por %p66, %p67
      %s70 = sadd.s32 %s69, 1
      %p73 = scmp.eq.s32.totalorder %s23, 3
      %p74 = scmp.ne.s32.totalorder %s69, %s71
      %p75 = scmp.eq.s32.totalorder %s23, 0
      %p76 = por %p74, %p75
      %p77 = scmp.ne.s32.totalorder %s69, %s71
      %p78 = scmp.eq.s32.totalorder %s28, 3
      %p79 = por %p77, %p78
      %p80 = scmp.ne.s32.totalorder %s71, %s72
      %p81 = scmp.eq.s32.totalorder %s28, 0
      %p82 = por %p80, %p81
      %p83 = scmp.ne.s32.totalorder %s71, %s72
      %p84 = scmp.eq.s32.totalorder %s29, 3
      %p85 = por %p83, %p84
      %p87 = scmp.ne.s32.totalorder %s72, %s86
      %p88 = scmp.eq.s32.totalorder %s29, 0
      %p89 = por %p87, %p88
      %s91 = sadd.s32 %s90, 1
      %p94 = scmp.eq.s32.totalorder %s23, 3
      %p95 = scmp.ne.s32.totalorder %s90, %s92
      %p96 = scmp.eq.s32.totalorder %s23, 0
      %p97 = por %p95, %p96
      %p98 = scmp.ne.s32.totalorder %s90, %s92
      %p99 = scmp.eq.s32.totalorder %s28, 3
      %p100 = por %p98, %p99
      %p101 = scmp.ne.s32.totalorder %s92, %s93
      %p102 = scmp.eq.s32.totalorder %s28, 0
      %p103 = por %p101, %p102
      %p104 = scmp.ne.s32.totalorder %s92, %s93
      %p105 = scmp.eq.s32.totalorder %s29, 3
      %p106 = por %p104, %p105
      %p108 = scmp.ne.s32.totalorder %s93, %s107
      %p109 = scmp.eq.s32.totalorder %s29, 0
      %p110 = por %p108, %p109
      %s112 = sadd.s32 %s111, 1
      %p115 = scmp.eq.s32.totalorder %s23, 3
      %p116 = scmp.ne.s32.totalorder %s111, %s113
      %p117 = scmp.eq.s32.totalorder %s23, 0
      %p118 = por %p116, %p117
      %p119 = scmp.ne.s32.totalorder %s111, %s113
      %p120 = scmp.eq.s32.totalorder %s28, 3
      %p121 = por %p119, %p120
      %p122 = scmp.ne.s32.totalorder %s113, %s114
      %p123 = scmp.eq.s32.totalorder %s28, 0
      %p124 = por %p122, %p123
      %p125 = scmp.ne.s32.totalorder %s113, %s114
      %p126 = scmp.eq.s32.totalorder %s29, 3
      %p127 = por %p125, %p126
      %p129 = scmp.ne.s32.totalorder %s114, %s128
      %p130 = scmp.eq.s32.totalorder %s29, 0
      %p131 = por %p129, %p130
      %s133 = sadd.s32 %s132, 1
      %p136 = scmp.eq.s32.totalorder %s23, 3
      %p137 = scmp.ne.s32.totalorder %s132, %s134
      %p138 = scmp.eq.s32.totalorder %s23, 0
      %p139 = por %p137, %p138
      %p140 = scmp.ne.s32.totalorder %s132, %s134
      %p141 = scmp.eq.s32.totalorder %s28, 3
      %p142 = por %p140, %p141
      %p143 = scmp.ne.s32.totalorder %s134, %s135
      %p144 = scmp.eq.s32.totalorder %s28, 0
      %p145 = por %p143, %p144
      %p146 = scmp.ne.s32.totalorder %s134, %s135
      %p147 = scmp.eq.s32.totalorder %s29, 3
      %p148 = por %p146, %p147
      %p150 = scmp.ne.s32.totalorder %s135, %s149
      %p151 = scmp.eq.s32.totalorder %s29, 0
      %p152 = por %p150, %p151
      %s154 = sadd.s32 %s153, 1
      %p157 = scmp.eq.s32.totalorder %s23, 3
      %p158 = scmp.ne.s32.totalorder %s153, %s155
      %p159 = scmp.eq.s32.totalorder %s23, 0
      %p160 = por %p158, %p159
      %p161 = scmp.ne.s32.totalorder %s153, %s155
      %p162 = scmp.eq.s32.totalorder %s28, 3
      %p163 = por %p161, %p162
      %p164 = scmp.ne.s32.totalorder %s155, %s156
      %p165 = scmp.eq.s32.totalorder %s28, 0
      %p166 = por %p164, %p165
      %p167 = scmp.ne.s32.totalorder %s155, %s156
      %p168 = scmp.eq.s32.totalorder %s29, 3
      %p169 = por %p167, %p168
      %p171 = scmp.ne.s32.totalorder %s156, %s170
      %p172 = scmp.eq.s32.totalorder %s29, 0
      %p173 = por %p171, %p172
      %s175 = sadd.s32 %s174, 1
      %p178 = scmp.eq.s32.totalorder %s23, 3
      %p179 = scmp.ne.s32.totalorder %s174, %s176
      %p180 = scmp.eq.s32.totalorder %s23, 0
      %p181 = por %p179, %p180
      %p182 = scmp.ne.s32.totalorder %s174, %s176
      %p183 = scmp.eq.s32.totalorder %s28, 3
      %p184 = por %p182, %p183
      %p185 = scmp.ne.s32.totalorder %s176, %s177
      %p186 = scmp.eq.s32.totalorder %s28, 0
      %p187 = por %p185, %p186
      %p188 = scmp.ne.s32.totalorder %s176, %s177
      %p189 = scmp.eq.s32.totalorder %s29, 3
      %p190 = por %p188, %p189
      %p192 = scmp.ne.s32.totalorder %s177, %s191
      %p193 = scmp.eq.s32.totalorder %s29, 0
      %p194 = por %p192, %p193
      %s196 = sadd.s32 %s195, 1
      %p199 = scmp.eq.s32.totalorder %s23, 3
      %p200 = scmp.ne.s32.totalorder %s195, %s197
      %p201 = scmp.eq.s32.totalorder %s23, 0
      %p202 = por %p200, %p201
      %p203 = scmp.ne.s32.totalorder %s195, %s197
      %p204 = scmp.eq.s32.totalorder %s28, 3
      %p205 = por %p203, %p204
      %p206 = scmp.ne.s32.totalorder %s197, %s198
      %p207 = scmp.eq.s32.totalorder %s28, 0
      %p208 = por %p206, %p207
      %p209 = scmp.ne.s32.totalorder %s197, %s198
      %p210 = scmp.eq.s32.totalorder %s29, 3
      %p211 = por %p209, %p210
      %p213 = scmp.ne.s32.totalorder %s198, %s212
      %p214 = scmp.eq.s32.totalorder %s29, 0
      %p215 = por %p213, %p214
      %s217 = sadd.s32 %s216, 1
      %p220 = scmp.eq.s32.totalorder %s23, 3
      %p221 = scmp.ne.s32.totalorder %s216, %s218
      %p222 = scmp.eq.s32.totalorder %s23, 0
      %p223 = por %p221, %p222
      %p224 = scmp.ne.s32.totalorder %s216, %s218
      %p225 = scmp.eq.s32.totalorder %s28, 3
      %p226 = por %p224, %p225
      %p227 = scmp.ne.s32.totalorder %s218, %s219
      %p228 = scmp.eq.s32.totalorder %s28, 0
      %p229 = por %p227, %p228
      %p230 = scmp.ne.s32.totalorder %s218, %s219
      %p231 = scmp.eq.s32.totalorder %s29, 3
      %p232 = por %p230, %p231
      %p234 = scmp.ne.s32.totalorder %s219, %s233
      %p235 = scmp.eq.s32.totalorder %s29, 0
      %p236 = por %p234, %p235
      %s238 = sadd.s32 %s237, 1
      %p241 = scmp.eq.s32.totalorder %s23, 3
      %p242 = scmp.ne.s32.totalorder %s237, %s239
      %p243 = scmp.eq.s32.totalorder %s23, 0
      %p244 = por %p242, %p243
      %p245 = scmp.ne.s32.totalorder %s237, %s239
      %p246 = scmp.eq.s32.totalorder %s28, 3
      %p247 = por %p245, %p246
      %p248 = scmp.ne.s32.totalorder %s239, %s240
      %p249 = scmp.eq.s32.totalorder %s28, 0
      %p250 = por %p248, %p249
      %p251 = scmp.ne.s32.totalorder %s239, %s240
      %p252 = scmp.eq.s32.totalorder %s29, 3
      %p253 = por %p251, %p252
      %p255 = scmp.ne.s32.totalorder %s240, %s254
      %p256 = scmp.eq.s32.totalorder %s29, 0
      %p257 = por %p255, %p256
      %s259 = sadd.s32 %s258, 1
      %p262 = scmp.eq.s32.totalorder %s23, 3
      %p263 = scmp.ne.s32.totalorder %s258, %s260
      %p264 = scmp.eq.s32.totalorder %s23, 0
      %p265 = por %p263, %p264
      %p266 = scmp.ne.s32.totalorder %s258, %s260
      %p267 = scmp.eq.s32.totalorder %s28, 3
      %p268 = por %p266, %p267
      %p269 = scmp.ne.s32.totalorder %s260, %s261
      %p270 = scmp.eq.s32.totalorder %s28, 0
      %p271 = por %p269, %p270
      %p272 = scmp.ne.s32.totalorder %s260, %s261
      %p273 = scmp.eq.s32.totalorder %s29, 3
      %p274 = por %p272, %p273
      %p276 = scmp.ne.s32.totalorder %s261, %s275
      %p277 = scmp.eq.s32.totalorder %s29, 0
      %p278 = por %p276, %p277
      %s280 = sadd.s32 %s279, 1
      %p283 = scmp.eq.s32.totalorder %s23, 3
      %p284 = scmp.ne.s32.totalorder %s279, %s281
      %p285 = scmp.eq.s32.totalorder %s23, 0
      %p286 = por %p284, %p285
      %p287 = scmp.ne.s32.totalorder %s279, %s281
      %p288 = scmp.eq.s32.totalorder %s28, 3
      %p289 = por %p287, %p288
      %p290 = scmp.ne.s32.totalorder %s281, %s282
      %p291 = scmp.eq.s32.totalorder %s28, 0
      %p292 = por %p290, %p291
      %p293 = scmp.ne.s32.totalorder %s281, %s282
      %p294 = scmp.eq.s32.totalorder %s29, 3
      %p295 = por %p293, %p294
      %p297 = scmp.ne.s32.totalorder %s282, %s296
      %p298 = scmp.eq.s32.totalorder %s29, 0
      %p299 = por %p297, %p298
      %s301 = sadd.s32 %s300, 1
      %p304 = scmp.eq.s32.totalorder %s23, 3
      %p305 = scmp.ne.s32.totalorder %s300, %s302
      %p306 = scmp.eq.s32.totalorder %s23, 0
      %p307 = por %p305, %p306
      %p308 = scmp.ne.s32.totalorder %s300, %s302
      %p309 = scmp.eq.s32.totalorder %s28, 3
      %p310 = por %p308, %p309
      %p311 = scmp.ne.s32.totalorder %s302, %s303
      %p312 = scmp.eq.s32.totalorder %s28, 0
      %p313 = por %p311, %p312
      %p314 = scmp.ne.s32.totalorder %s302, %s303
      %p315 = scmp.eq.s32.totalorder %s29, 3
      %p316 = por %p314, %p315
      %p318 = scmp.ne.s32.totalorder %s303, %s317
      %p319 = scmp.eq.s32.totalorder %s29, 0
      %p320 = por %p318, %p319
      %s322 = sadd.s32 %s321, 1
      %p325 = scmp.eq.s32.totalorder %s23, 3
      %p326 = scmp.ne.s32.totalorder %s321, %s323
      %p327 = scmp.eq.s32.totalorder %s23, 0
      %p328 = por %p326, %p327
      %p329 = scmp.ne.s32.totalorder %s321, %s323
      %p330 = scmp.eq.s32.totalorder %s28, 3
      %p331 = por %p329, %p330
      %p332 = scmp.ne.s32.totalorder %s323, %s324
      %p333 = scmp.eq.s32.totalorder %s28, 0
      %p334 = por %p332, %p333
      %p335 = scmp.ne.s32.totalorder %s323, %s324
      %p336 = scmp.eq.s32.totalorder %s29, 3
      %p337 = por %p335, %p336
      %p339 = scmp.ne.s32.totalorder %s324, %s338
      %p340 = scmp.eq.s32.totalorder %s29, 0
      %p341 = por %p339, %p340
      %s342 = ssub.s32 %s31, %s38
      %s343 = ssub.s32 %s30, %s42
      %s344 = sor.u32 %s342, %s343
      %p345 = scmp.eq.s32.totalorder %s344, 0
      %s347 = sadd.s32 %s346, 1
      %s348 = scalar_select %p345, %s346, %s347
      %p351 = pneg %p345
      %p352 = scmp.eq.s32.totalorder %s23, 3
      %p353 = por %p351, %p352
      %p354 = scmp.ne.s32.totalorder %s346, %s349
      %p355 = scmp.eq.s32.totalorder %s23, 0
      %p356 = por %p354, %p355
      %p357 = scmp.ne.s32.totalorder %s346, %s349
      %p358 = scmp.eq.s32.totalorder %s28, 3
      %p359 = por %p357, %p358
      %p360 = scmp.ne.s32.totalorder %s349, %s350
      %p361 = scmp.eq.s32.totalorder %s28, 0
      %p362 = por %p360, %p361
      %p363 = scmp.ne.s32.totalorder %s349, %s350
      %p364 = scmp.eq.s32.totalorder %s29, 3
      %p365 = por %p363, %p364
      %p367 = scmp.ne.s32.totalorder %s350, %s366
      %p368 = scmp.eq.s32.totalorder %s29, 0
      %p369 = por %p367, %p368
      %p370 = scmp.le.s32.totalorder 1, %s23
      %p371 = scmp.lt.s32.totalorder %s23, 5
      %p372 = pnand %p370, %p371
      %p373 = pneg %p372
      // Predicated region
      $region9: #{tpu_custom_call.1} parent=5 // pred_check
        _
      $region10: #{tpu_custom_call.1} parent=5 // pred_check_branch
        %375 = sbr.rel (%p372) target = $region12
      $region11: #{tpu_custom_call.1} parent=5 // pred_region
        %s376 = ssub.s32 %s23, 1
        // Predicated region
        $region13: #{tpu_custom_call.1} parent=11 // pred_check
          %p377 = pneg %p82
        $region14: #{tpu_custom_call.1} parent=11 // pred_check_branch
          %379 = sbr.rel (%p377) target = $region16
        $region15: #{tpu_custom_call.1} parent=11 // pred_region
          _
        $region16: #{tpu_custom_call.1} parent=11 // pred_fallthru
          _
        // Predicated region
        $region17: #{tpu_custom_call.1} parent=11 // pred_check
          %p380 = pneg %p103
        $region18: #{tpu_custom_call.1} parent=11 // pred_check_branch
          %382 = sbr.rel (%p380) target = $region20
        $region19: #{tpu_custom_call.1} parent=11 // pred_region
          _
        $region20: #{tpu_custom_call.1} parent=11 // pred_fallthru
          _
        // Predicated region
        $region21: #{tpu_custom_call.1} parent=11 // pred_check
          %p383 = pneg %p124
        $region22: #{tpu_custom_call.1} parent=11 // pred_check_branch
          %385 = sbr.rel (%p383) target = $region24
        $region23: #{tpu_custom_call.1} parent=11 // pred_region
          _
        $region24: #{tpu_custom_call.1} parent=11 // pred_fallthru
          _
        // Predicated region
        $region25: #{tpu_custom_call.1} parent=11 // pred_check
          %p386 = pneg %p145
        $region26: #{tpu_custom_call.1} parent=11 // pred_check_branch
          %388 = sbr.rel (%p386) target = $region28
        $region27: #{tpu_custom_call.1} parent=11 // pred_region
          _
        $region28: #{tpu_custom_call.1} parent=11 // pred_fallthru
          _
        // Predicated region
        $region29: #{tpu_custom_call.1} parent=11 // pred_check
          %p389 = pneg %p166
        $region30: #{tpu_custom_call.1} parent=11 // pred_check_branch
          %391 = sbr.rel (%p389) target = $region32
        $region31: #{tpu_custom_call.1} parent=11 // pred_region
          _
        $region32: #{tpu_custom_call.1} parent=11 // pred_fallthru
          _
        // Predicated region
        $region33: #{tpu_custom_call.1} parent=11 // pred_check
          %p392 = pneg %p187
        $region34: #{tpu_custom_call.1} parent=11 // pred_check_branch
          %394 = sbr.rel (%p392) target = $region36
        $region35: #{tpu_custom_call.1} parent=11 // pred_region
          _
        $region36: #{tpu_custom_call.1} parent=11 // pred_fallthru
          _
        // Predicated region
        $region37: #{tpu_custom_call.1} parent=11 // pred_check
          %p395 = pneg %p208
        $region38: #{tpu_custom_call.1} parent=11 // pred_check_branch
          %397 = sbr.rel (%p395) target = $region40
        $region39: #{tpu_custom_call.1} parent=11 // pred_region
          _
        $region40: #{tpu_custom_call.1} parent=11 // pred_fallthru
          _
        // Predicated region
        $region41: #{tpu_custom_call.1} parent=11 // pred_check
          %p398 = pneg %p229
        $region42: #{tpu_custom_call.1} parent=11 // pred_check_branch
          %400 = sbr.rel (%p398) target = $region44
        $region43: #{tpu_custom_call.1} parent=11 // pred_region
          _
        $region44: #{tpu_custom_call.1} parent=11 // pred_fallthru
          _
        // Predicated region
        $region45: #{tpu_custom_call.1} parent=11 // pred_check
          %p401 = pneg %p250
        $region46: #{tpu_custom_call.1} parent=11 // pred_check_branch
          %403 = sbr.rel (%p401) target = $region48
        $region47: #{tpu_custom_call.1} parent=11 // pred_region
          _
        $region48: #{tpu_custom_call.1} parent=11 // pred_fallthru
          _
        // Predicated region
        $region49: #{tpu_custom_call.1} parent=11 // pred_check
          %p404 = pneg %p271
        $region50: #{tpu_custom_call.1} parent=11 // pred_check_branch
          %406 = sbr.rel (%p404) target = $region52
        $region51: #{tpu_custom_call.1} parent=11 // pred_region
          _
        $region52: #{tpu_custom_call.1} parent=11 // pred_fallthru
          _
        // Predicated region
        $region53: #{tpu_custom_call.1} parent=11 // pred_check
          %p407 = pneg %p292
        $region54: #{tpu_custom_call.1} parent=11 // pred_check_branch
          %409 = sbr.rel (%p407) target = $region56
        $region55: #{tpu_custom_call.1} parent=11 // pred_region
          _
        $region56: #{tpu_custom_call.1} parent=11 // pred_fallthru
          _
        // Predicated region
        $region57: #{tpu_custom_call.1} parent=11 // pred_check
          %p410 = pneg %p313
        $region58: #{tpu_custom_call.1} parent=11 // pred_check_branch
          %412 = sbr.rel (%p410) target = $region60
        $region59: #{tpu_custom_call.1} parent=11 // pred_region
          _
        $region60: #{tpu_custom_call.1} parent=11 // pred_fallthru
          _
        // Predicated region
        $region61: #{tpu_custom_call.1} parent=11 // pred_check
          %p413 = pneg %p334
        $region62: #{tpu_custom_call.1} parent=11 // pred_check_branch
          %415 = sbr.rel (%p413) target = $region64
        $region63: #{tpu_custom_call.1} parent=11 // pred_region
          _
        $region64: #{tpu_custom_call.1} parent=11 // pred_fallthru
          _
      $region12: #{tpu_custom_call.1} parent=5 // pred_fallthru
        _
      %p416 = scmp.lt.s32.totalorder %s23, 4
      // Predicated region
      $region65: #{tpu_custom_call.1} parent=5 // pred_check
        %p417 = pneg %p416
      $region66: #{tpu_custom_call.1} parent=5 // pred_check_branch
        %419 = sbr.rel (%p417) target = $region68
      $region67: #{tpu_custom_call.1} parent=5 // pred_region
        // Predicated region
        $region69: #{tpu_custom_call.1} parent=67 // pred_check
          %p420 = pneg %p55
        $region70: #{tpu_custom_call.1} parent=67 // pred_check_branch
          %422 = sbr.rel (%p420) target = $region72
        $region71: #{tpu_custom_call.1} parent=67 // pred_region
          %p423 = scmp.lt.s32.totalorder %s30, 1
          %s424 = scalar_select %p423, %s30, 1
          %s425 = smul.addr %s424, 8
          %s426 = scalar_lea.vmem %s0, %s425
        $region72: #{tpu_custom_call.1} parent=67 // pred_fallthru
          _
      $region68: #{tpu_custom_call.1} parent=5 // pred_fallthru
        _
      %p427 = scmp.le.s32.totalorder 1, %s23
      %p428 = scmp.lt.s32.totalorder %s23, 5
      %p429 = pnand %p427, %p428
      %p430 = pneg %p429
      // Predicated region
      $region73: #{tpu_custom_call.1} parent=5 // pred_check
        _
      $region74: #{tpu_custom_call.1} parent=5 // pred_check_branch
        %432 = sbr.rel (%p429) target = $region76
      $region75: #{tpu_custom_call.1} parent=5 // pred_region
        %s433 = ssub.s32 %s23, 1
        %p434 = scmp.lt.s32.totalorder %s32, 1
        %s435 = scalar_select %p434, %s32, 1
        %s436 = smul.addr %s435, 8
        %s437 = scalar_lea.vmem %s0, %s436
        %p438 = pneg %p61
        %p439 = pneg %p58
        %p440 = pneg %p82
        %p441 = pneg %p79
        %p442 = pneg %p103
        %p443 = pneg %p100
        %p444 = pneg %p124
        %p445 = pneg %p121
        %p446 = pneg %p145
        %p447 = pneg %p142
        %p448 = pneg %p166
        %p449 = pneg %p163
        %p450 = pneg %p187
        %p451 = pneg %p184
        %p452 = pneg %p208
        %p453 = pneg %p205
        %p454 = pneg %p229
        %p455 = pneg %p226
        %p456 = pneg %p250
        %p457 = pneg %p247
        %p458 = pneg %p271
        %p459 = pneg %p268
        %p460 = pneg %p292
        %p461 = pneg %p289
        %p462 = pneg %p313
        %p463 = pneg %p310
        %p464 = pneg %p334
        %p465 = pneg %p331
        %p466 = pneg %p362
        %p467 = pneg %p359
        %s468 = sand.u32 %s349, 1
        %s469 = scalar_lea.sflag [#allocation4], %s468
        %s470 = sand.u32 %s349, 1
        %s471 = smul.addr %s470, 8
        %s472 = scalar_lea.vmem [#allocation3], %s471
        %p473 = scmp.lt.s32.totalorder %s32, 1
        %s474 = scalar_select %p473, %s32, 1
        %s475 = smul.addr %s474, 8
        %s476 = scalar_lea.vmem %s0, %s475
        %p478 = scmp.eq.s32.totalorder %s33, 0
        // Predicated region
        $region77: #{tpu_custom_call.1} parent=75 // pred_check
          %p479 = pneg %p478
        $region78: #{tpu_custom_call.1} parent=75 // pred_check_branch
          %481 = sbr.rel (%p479) target = $region80
        $region79: #{tpu_custom_call.1} parent=75 // pred_region
          %v482 = vld [vmem:[%s476] sm:$0xff]
          %vm483 = vcmask 261120
          %484 = vst.msk [vmem:[#allocation2] sm:$0xff] %vm483, %v482
        $region80: #{tpu_custom_call.1} parent=75 // pred_fallthru
          _
        %v485 = vld [vmem:[#allocation2] sm:$0xff]
        %v486 = vld [vmem:[%s1] sm:$0xff]
        %v487 = vpack.c.bf16 %v485, %v485
        %v488 = vld [vmem:[%s2] sm:$0xf]
        %v489 = vld [vmem:[%s2 + $0x4] sm:$0xf]
        %v490 = vld [vmem:[%s2 + $0x8] sm:$0xf]
        %v491 = vld [vmem:[%s2 + $0xc] sm:$0xf]
        %v492 = vld [vmem:[%s3] sm:$0x1]
        %v494 = vlaneseq
        %v495 = vshrl.u32 %v494, 7
        %v496 = vsub.s32 0, %v495
        %v497 = vrot.slane %v492, %v496
        %v503 = vunpack.c.l.b16 %v488
        %v504 = vunpack.c.l.b16 %v489
        %v505 = vunpack.c.l.b16 %v490
        %v506 = vunpack.c.l.b16 %v491
        %v507 = vpack.c.b16 %v504, %v503
        %v508 = vpack.c.b16 %v506, %v505
        %vm511 = vcmask 261120
        %v513 = vsel %vm511, %v487, 0
        %515 = vmatprep.subr.bf16.mxu0 0
        %516 = vmatpush1.bf16.msra.mxu0 %v507
        %517 = vmatprep.subr.bf16.mxu0 0
        %518 = vmatpush1.bf16.msra.mxu0 %v508
        %519 = vmatprep.subr.bf16.mxu0 0
        %520 = vmatpush1.bf16.msra.mxu0 0
        %521 = vmatprep.subr.bf16.mxu0 0
        %522 = vmatpush1.bf16.msra.mxu0 0
        %523 = vmatprep.subr.bf16.mxu0 0
        %524 = vmatpush1.bf16.msra.mxu0 0
        %525 = vmatprep.subr.bf16.mxu0 0
        %526 = vmatpush1.bf16.msra.mxu0 0
        %527 = vmatprep.subr.bf16.mxu0 0
        %528 = vmatpush1.bf16.msra.mxu0 0
        %529 = vmatprep.subr.bf16.mxu0 0
        %530 = vmatpush1.bf16.msra.mxu0 0
        %531 = vmatprep.subr.bf16.mxu0 0
        %532 = vmatpush1.bf16.msra.mxu0 0
        %533 = vmatprep.subr.bf16.mxu0 0
        %534 = vmatpush1.bf16.msra.mxu0 0
        %535 = vmatprep.subr.bf16.mxu0 0
        %536 = vmatpush1.bf16.msra.mxu0 0
        %537 = vmatprep.subr.bf16.mxu0 0
        %538 = vmatpush1.bf16.msra.mxu0 0
        %539 = vmatprep.subr.bf16.mxu0 0
        %540 = vmatpush1.bf16.msra.mxu0 0
        %541 = vmatprep.subr.bf16.mxu0 0
        %542 = vmatpush1.bf16.msra.mxu0 0
        %543 = vmatprep.subr.bf16.mxu0 0
        %544 = vmatpush1.bf16.msra.mxu0 0
        %545 = vmatprep.subr.bf16.mxu0 0
        %546 = vmatpush1.bf16.msra.mxu0 0
        %547 = vmatprep.mubr.bf16.mxu0 0
        %548 = vmatmul.mubr.bf16.gmra.mrb[0].mxu0 %v513
        %v549 = vpop.f32.mrb[0].mxu0
        %v550 = vadd.f32 %v497, %v549
        %v551 = vpop.f32.mrb[0].mxu0
        %v552 = vpop.f32.mrb[0].mxu0
        %v553 = vpop.f32.mrb[0].mxu0
        %554 = vdwg.mxu0
        %556 = vrot.lane.b32.xlu0 %v550, 112
        %v557 = vpop.permute.xlu0 %556
        %v559 = vcombine.high %v550, 0.0
        %v561 = vunpack.c.l.s4 1983009808
        %v562 = vunpack.c.0.s8 %v561
        %v563 = vlaneseq
        %v564 = vshrl.u32 %v563, 7
        %v565 = vsub.s32 %v562, %v564
        %v566 = vrot.slane %v550, %v565
        %v568 = vunpack.c.l.s4 1983009808
        %v569 = vunpack.c.0.s8 %v568
        %v570 = vlaneseq
        %v571 = vshrl.u32 %v570, 7
        %v572 = vsub.s32 %v569, %v571
        %v573 = vrot.slane %v559, %v572
        %v574 = vcombine.high %v557, 0.0
        %v576 = vunpack.c.l.s4 1983009808
        %v577 = vunpack.c.0.s8 %v576
        %v578 = vlaneseq
        %v579 = vshrl.u32 %v578, 7
        %v580 = vsub.s32 %v577, %v579
        %v581 = vrot.slane %v557, %v580
        %v583 = vunpack.c.l.s4 1983009808
        %v584 = vunpack.c.0.s8 %v583
        %v585 = vlaneseq
        %v586 = vshrl.u32 %v585, 7
        %v587 = vsub.s32 %v584, %v586
        %v588 = vrot.slane %v574, %v587
        %v589 = vcombine.low %v566, %v581
        %v590 = vcombine.high %v566, %v581
        %v592 = vunpack.c.l.s4 1934713408
        %v593 = vunpack.c.0.s8 %v592
        %v594 = vlaneseq
        %v595 = vshrl.u32 %v594, 7
        %v596 = vsub.s32 %v593, %v595
        %v597 = vrot.slane %v589, %v596
        %v599 = vunpack.c.l.s4 1934713408
        %v600 = vunpack.c.0.s8 %v599
        %v601 = vlaneseq
        %v602 = vshrl.u32 %v601, 7
        %v603 = vsub.s32 %v600, %v602
        %v604 = vrot.slane %v590, %v603
        %v605 = vcombine.low %v573, %v588
        %v606 = vcombine.high %v573, %v588
        %v608 = vunpack.c.l.s4 1934713408
        %v609 = vunpack.c.0.s8 %v608
        %v610 = vlaneseq
        %v611 = vshrl.u32 %v610, 7
        %v612 = vsub.s32 %v609, %v611
        %v613 = vrot.slane %v605, %v612
        %v615 = vunpack.c.l.s4 1934713408
        %v616 = vunpack.c.0.s8 %v615
        %v617 = vlaneseq
        %v618 = vshrl.u32 %v617, 7
        %v619 = vsub.s32 %v616, %v618
        %v620 = vrot.slane %v606, %v619
        %v621 = vcombine.high %v597, 0.0
        %v622 = vcombine.high %v604, 0.0
        %v623 = vcombine.high %v613, 0.0
        %v624 = vcombine.high %v620, 0.0
        %v625 = vcombine.low %v597, %v604
        %v627 = vunpack.c.l.s4 1983009808
        %v628 = vunpack.c.0.s8 %v627
        %v629 = vlaneseq
        %v630 = vshrl.u32 %v629, 7
        %v631 = vsub.s32 %v628, %v630
        %v632 = vrot.slane %v625, %v631
        %v633 = vcombine.low %v621, %v622
        %v635 = vunpack.c.l.s4 1983009808
        %v636 = vunpack.c.0.s8 %v635
        %v637 = vlaneseq
        %v638 = vshrl.u32 %v637, 7
        %v639 = vsub.s32 %v636, %v638
        %v640 = vrot.slane %v633, %v639
        %v641 = vcombine.low %v613, %v620
        %v643 = vunpack.c.l.s4 1983009808
        %v644 = vunpack.c.0.s8 %v643
        %v645 = vlaneseq
        %v646 = vshrl.u32 %v645, 7
        %v647 = vsub.s32 %v644, %v646
        %v648 = vrot.slane %v641, %v647
        %v649 = vcombine.low %v623, %v624
        %v651 = vunpack.c.l.s4 1983009808
        %v652 = vunpack.c.0.s8 %v651
        %v653 = vlaneseq
        %v654 = vshrl.u32 %v653, 7
        %v655 = vsub.s32 %v652, %v654
        %v656 = vrot.slane %v649, %v655
        %v657 = vcombine.low %v632, %v640
        %v659 = vunpack.c.l.s4 1934713408
        %v660 = vunpack.c.0.s8 %v659
        %v661 = vlaneseq
        %v662 = vshrl.u32 %v661, 7
        %v663 = vsub.s32 %v660, %v662
        %v664 = vrot.slane %v657, %v663
        %v665 = vcombine.low %v648, %v656
        %v667 = vunpack.c.l.s4 1934713408
        %v668 = vunpack.c.0.s8 %v667
        %v669 = vlaneseq
        %v670 = vshrl.u32 %v669, 7
        %v671 = vsub.s32 %v668, %v670
        %v672 = vrot.slane %v665, %v671
        %v673 = vcombine.low %v664, %v672
        %v674 = vcombine.high %v664, %v672
        %v675 = vpack.c.bf16 %v673, %v673
        %v676 = vpack.c.bf16 %v674, %v674
        %677 = vrot.lane.b32.xlu0 %v550, 96
        %v678 = vpop.permute.xlu0 %677
        %679 = vrot.lane.b32.xlu0 %v557, 96
        %v680 = vpop.permute.xlu0 %679
        %v683 = vcombine.high %v678, 0.0
        %v685 = vunpack.c.l.s4 1983009808
        %v686 = vunpack.c.0.s8 %v685
        %v687 = vlaneseq
        %v688 = vshrl.u32 %v687, 7
        %v689 = vsub.s32 %v686, %v688
        %v690 = vrot.slane %v678, %v689
        %v692 = vunpack.c.l.s4 1983009808
        %v693 = vunpack.c.0.s8 %v692
        %v694 = vlaneseq
        %v695 = vshrl.u32 %v694, 7
        %v696 = vsub.s32 %v693, %v695
        %v697 = vrot.slane %v683, %v696
        %v698 = vcombine.high %v680, 0.0
        %v700 = vunpack.c.l.s4 1983009808
        %v701 = vunpack.c.0.s8 %v700
        %v702 = vlaneseq
        %v703 = vshrl.u32 %v702, 7
        %v704 = vsub.s32 %v701, %v703
        %v705 = vrot.slane %v680, %v704
        %v707 = vunpack.c.l.s4 1983009808
        %v708 = vunpack.c.0.s8 %v707
        %v709 = vlaneseq
        %v710 = vshrl.u32 %v709, 7
        %v711 = vsub.s32 %v708, %v710
        %v712 = vrot.slane %v698, %v711
        %v713 = vcombine.low %v690, %v705
        %v714 = vcombine.high %v690, %v705
        %v716 = vunpack.c.l.s4 1934713408
        %v717 = vunpack.c.0.s8 %v716
        %v718 = vlaneseq
        %v719 = vshrl.u32 %v718, 7
        %v720 = vsub.s32 %v717, %v719
        %v721 = vrot.slane %v713, %v720
        %v723 = vunpack.c.l.s4 1934713408
        %v724 = vunpack.c.0.s8 %v723
        %v725 = vlaneseq
        %v726 = vshrl.u32 %v725, 7
        %v727 = vsub.s32 %v724, %v726
        %v728 = vrot.slane %v714, %v727
        %v729 = vcombine.low %v697, %v712
        %v730 = vcombine.high %v697, %v712
        %v732 = vunpack.c.l.s4 1934713408
        %v733 = vunpack.c.0.s8 %v732
        %v734 = vlaneseq
        %v735 = vshrl.u32 %v734, 7
        %v736 = vsub.s32 %v733, %v735
        %v737 = vrot.slane %v729, %v736
        %v739 = vunpack.c.l.s4 1934713408
        %v740 = vunpack.c.0.s8 %v739
        %v741 = vlaneseq
        %v742 = vshrl.u32 %v741, 7
        %v743 = vsub.s32 %v740, %v742
        %v744 = vrot.slane %v730, %v743
        %v745 = vcombine.high %v721, 0.0
        %v746 = vcombine.high %v728, 0.0
        %v747 = vcombine.high %v737, 0.0
        %v748 = vcombine.high %v744, 0.0
        %v749 = vcombine.low %v721, %v728
        %v751 = vunpack.c.l.s4 1983009808
        %v752 = vunpack.c.0.s8 %v751
        %v753 = vlaneseq
        %v754 = vshrl.u32 %v753, 7
        %v755 = vsub.s32 %v752, %v754
        %v756 = vrot.slane %v749, %v755
        %v757 = vcombine.low %v745, %v746
        %v759 = vunpack.c.l.s4 1983009808
        %v760 = vunpack.c.0.s8 %v759
        %v761 = vlaneseq
        %v762 = vshrl.u32 %v761, 7
        %v763 = vsub.s32 %v760, %v762
        %v764 = vrot.slane %v757, %v763
        %v765 = vcombine.low %v737, %v744
        %v767 = vunpack.c.l.s4 1983009808
        %v768 = vunpack.c.0.s8 %v767
        %v769 = vlaneseq
        %v770 = vshrl.u32 %v769, 7
        %v771 = vsub.s32 %v768, %v770
        %v772 = vrot.slane %v765, %v771
        %v773 = vcombine.low %v747, %v748
        %v775 = vunpack.c.l.s4 1983009808
        %v776 = vunpack.c.0.s8 %v775
        %v777 = vlaneseq
        %v778 = vshrl.u32 %v777, 7
        %v779 = vsub.s32 %v776, %v778
        %v780 = vrot.slane %v773, %v779
        %v781 = vcombine.low %v756, %v764
        %v783 = vunpack.c.l.s4 1934713408
        %v784 = vunpack.c.0.s8 %v783
        %v785 = vlaneseq
        %v786 = vshrl.u32 %v785, 7
        %v787 = vsub.s32 %v784, %v786
        %v788 = vrot.slane %v781, %v787
        %v789 = vcombine.low %v772, %v780
        %v791 = vunpack.c.l.s4 1934713408
        %v792 = vunpack.c.0.s8 %v791
        %v793 = vlaneseq
        %v794 = vshrl.u32 %v793, 7
        %v795 = vsub.s32 %v792, %v794
        %v796 = vrot.slane %v789, %v795
        %v797 = vcombine.low %v788, %v796
        %v798 = vcombine.high %v788, %v796
        %v799 = vpack.c.bf16 %v797, %v797
        %v800 = vpack.c.bf16 %v798, %v798
        %801 = vrot.lane.b32.xlu0 %v550, 64
        %v802 = vpop.permute.xlu0 %801
        %803 = vrot.lane.b32.xlu0 %v557, 64
        %v804 = vpop.permute.xlu0 %803
        %v807 = vcombine.high %v802, 0.0
        %v809 = vunpack.c.l.s4 1983009808
        %v810 = vunpack.c.0.s8 %v809
        %v811 = vlaneseq
        %v812 = vshrl.u32 %v811, 7
        %v813 = vsub.s32 %v810, %v812
        %v814 = vrot.slane %v802, %v813
        %v816 = vunpack.c.l.s4 1983009808
        %v817 = vunpack.c.0.s8 %v816
        %v818 = vlaneseq
        %v819 = vshrl.u32 %v818, 7
        %v820 = vsub.s32 %v817, %v819
        %v821 = vrot.slane %v807, %v820
        %v822 = vcombine.high %v804, 0.0
        %v824 = vunpack.c.l.s4 1983009808
        %v825 = vunpack.c.0.s8 %v824
        %v826 = vlaneseq
        %v827 = vshrl.u32 %v826, 7
        %v828 = vsub.s32 %v825, %v827
        %v829 = vrot.slane %v804, %v828
        %v831 = vunpack.c.l.s4 1983009808
        %v832 = vunpack.c.0.s8 %v831
        %v833 = vlaneseq
        %v834 = vshrl.u32 %v833, 7
        %v835 = vsub.s32 %v832, %v834
        %v836 = vrot.slane %v822, %v835
        %v837 = vcombine.low %v814, %v829
        %v838 = vcombine.high %v814, %v829
        %v840 = vunpack.c.l.s4 1934713408
        %v841 = vunpack.c.0.s8 %v840
        %v842 = vlaneseq
        %v843 = vshrl.u32 %v842, 7
        %v844 = vsub.s32 %v841, %v843
        %v845 = vrot.slane %v837, %v844
        %v847 = vunpack.c.l.s4 1934713408
        %v848 = vunpack.c.0.s8 %v847
        %v849 = vlaneseq
        %v850 = vshrl.u32 %v849, 7
        %v851 = vsub.s32 %v848, %v850
        %v852 = vrot.slane %v838, %v851
        %v853 = vcombine.low %v821, %v836
        %v854 = vcombine.high %v821, %v836
        %v856 = vunpack.c.l.s4 1934713408
        %v857 = vunpack.c.0.s8 %v856
        %v858 = vlaneseq
        %v859 = vshrl.u32 %v858, 7
        %v860 = vsub.s32 %v857, %v859
        %v861 = vrot.slane %v853, %v860
        %v863 = vunpack.c.l.s4 1934713408
        %v864 = vunpack.c.0.s8 %v863
        %v865 = vlaneseq
        %v866 = vshrl.u32 %v865, 7
        %v867 = vsub.s32 %v864, %v866
        %v868 = vrot.slane %v854, %v867
        %v869 = vcombine.high %v845, 0.0
        %v870 = vcombine.high %v852, 0.0
        %v871 = vcombine.high %v861, 0.0
        %v872 = vcombine.high %v868, 0.0
        %v873 = vcombine.low %v845, %v852
        %v875 = vunpack.c.l.s4 1983009808
        %v876 = vunpack.c.0.s8 %v875
        %v877 = vlaneseq
        %v878 = vshrl.u32 %v877, 7
        %v879 = vsub.s32 %v876, %v878
        %v880 = vrot.slane %v873, %v879
        %v881 = vcombine.low %v869, %v870
        %v883 = vunpack.c.l.s4 1983009808
        %v884 = vunpack.c.0.s8 %v883
        %v885 = vlaneseq
        %v886 = vshrl.u32 %v885, 7
        %v887 = vsub.s32 %v884, %v886
        %v888 = vrot.slane %v881, %v887
        %v889 = vcombine.low %v861, %v868
        %v891 = vunpack.c.l.s4 1983009808
        %v892 = vunpack.c.0.s8 %v891
        %v893 = vlaneseq
        %v894 = vshrl.u32 %v893, 7
        %v895 = vsub.s32 %v892, %v894
        %v896 = vrot.slane %v889, %v895
        %v897 = vcombine.low %v871, %v872
        %v899 = vunpack.c.l.s4 1983009808
        %v900 = vunpack.c.0.s8 %v899
        %v901 = vlaneseq
        %v902 = vshrl.u32 %v901, 7
        %v903 = vsub.s32 %v900, %v902
        %v904 = vrot.slane %v897, %v903
        %v905 = vcombine.low %v880, %v888
        %v907 = vunpack.c.l.s4 1934713408
        %v908 = vunpack.c.0.s8 %v907
        %v909 = vlaneseq
        %v910 = vshrl.u32 %v909, 7
        %v911 = vsub.s32 %v908, %v910
        %v912 = vrot.slane %v905, %v911
        %v913 = vcombine.low %v896, %v904
        %v915 = vunpack.c.l.s4 1934713408
        %v916 = vunpack.c.0.s8 %v915
        %v917 = vlaneseq
        %v918 = vshrl.u32 %v917, 7
        %v919 = vsub.s32 %v916, %v918
        %v920 = vrot.slane %v913, %v919
        %v921 = vcombine.low %v912, %v920
        %v922 = vcombine.high %v912, %v920
        %v923 = vpack.c.bf16 %v921, %v921
        %v924 = vpack.c.bf16 %v922, %v922
        %vm925 = vcmask 130048
        %v927 = vsel %vm925, %v675, 0
        %v930 = vsel %vm925, %v799, 0
        %932 = vmatprep.subr.bf16.mxu0 0
        %933 = vmatpush1.bf16.xpose.msra.mxu0 %v930
        %934 = vmatprep.subr.bf16.mxu0 0
        %935 = vmatpush1.bf16.xpose.msra.mxu0 0
        %936 = vmatprep.subr.bf16.mxu0 0
        %937 = vmatpush1.bf16.xpose.msra.mxu0 0
        %938 = vmatprep.subr.bf16.mxu0 0
        %939 = vmatpush1.bf16.xpose.msra.mxu0 0
        %940 = vmatprep.subr.bf16.mxu0 0
        %941 = vmatpush1.bf16.xpose.msra.mxu0 0
        %942 = vmatprep.subr.bf16.mxu0 0
        %943 = vmatpush1.bf16.xpose.msra.mxu0 0
        %944 = vmatprep.subr.bf16.mxu0 0
        %945 = vmatpush1.bf16.xpose.msra.mxu0 0
        %946 = vmatprep.subr.bf16.mxu0 0
        %947 = vmatpush1.bf16.xpose.msra.mxu0 0
        %948 = vmatprep.subr.bf16.mxu0 0
        %949 = vmatpush1.bf16.xpose.msra.mxu0 0
        %950 = vmatprep.subr.bf16.mxu0 0
        %951 = vmatpush1.bf16.xpose.msra.mxu0 0
        %952 = vmatprep.subr.bf16.mxu0 0
        %953 = vmatpush1.bf16.xpose.msra.mxu0 0
        %954 = vmatprep.subr.bf16.mxu0 0
        %955 = vmatpush1.bf16.xpose.msra.mxu0 0
        %956 = vmatprep.subr.bf16.mxu0 0
        %957 = vmatpush1.bf16.xpose.msra.mxu0 0
        %958 = vmatprep.subr.bf16.mxu0 0
        %959 = vmatpush1.bf16.xpose.msra.mxu0 0
        %960 = vmatprep.subr.bf16.mxu0 0
        %961 = vmatpush1.bf16.xpose.msra.mxu0 0
        %962 = vmatprep.subr.bf16.mxu0 0
        %963 = vmatpush1.bf16.xpose.msra.mxu0 0
        %964 = vmatprep.mubr.bf16.mxu0 0
        %965 = vmatmul.mubr.bf16.gmra.mrb[0].mxu0 %v927
        %v966 = vpop.f32.mrb[0].mxu0
        %v967 = vadd.f32 %v486, %v966
        %v968 = vpop.f32.mrb[0].mxu0
        %v969 = vpop.f32.mrb[0].mxu0
        %v970 = vpop.f32.mrb[0].mxu0
        %971 = vdwg.mxu0
        %v973 = vsel %vm925, %v676, 0
        %v976 = vsel %vm925, %v800, 0
        %978 = vmatprep.subr.bf16.mxu0 0
        %979 = vmatpush1.bf16.xpose.msra.mxu0 %v976
        %980 = vmatprep.subr.bf16.mxu0 0
        %981 = vmatpush1.bf16.xpose.msra.mxu0 0
        %982 = vmatprep.subr.bf16.mxu0 0
        %983 = vmatpush1.bf16.xpose.msra.mxu0 0
        %984 = vmatprep.subr.bf16.mxu0 0
        %985 = vmatpush1.bf16.xpose.msra.mxu0 0
        %986 = vmatprep.subr.bf16.mxu0 0
        %987 = vmatpush1.bf16.xpose.msra.mxu0 0
        %988 = vmatprep.subr.bf16.mxu0 0
        %989 = vmatpush1.bf16.xpose.msra.mxu0 0
        %990 = vmatprep.subr.bf16.mxu0 0
        %991 = vmatpush1.bf16.xpose.msra.mxu0 0
        %992 = vmatprep.subr.bf16.mxu0 0
        %993 = vmatpush1.bf16.xpose.msra.mxu0 0
        %994 = vmatprep.subr.bf16.mxu0 0
        %995 = vmatpush1.bf16.xpose.msra.mxu0 0
        %996 = vmatprep.subr.bf16.mxu0 0
        %997 = vmatpush1.bf16.xpose.msra.mxu0 0
        %998 = vmatprep.subr.bf16.mxu0 0
        %999 = vmatpush1.bf16.xpose.msra.mxu0 0
        %1000 = vmatprep.subr.bf16.mxu0 0
        %1001 = vmatpush1.bf16.xpose.msra.mxu0 0
        %1002 = vmatprep.subr.bf16.mxu0 0
        %1003 = vmatpush1.bf16.xpose.msra.mxu0 0
        %1004 = vmatprep.subr.bf16.mxu0 0
        %1005 = vmatpush1.bf16.xpose.msra.mxu0 0
        %1006 = vmatprep.subr.bf16.mxu0 0
        %1007 = vmatpush1.bf16.xpose.msra.mxu0 0
        %1008 = vmatprep.subr.bf16.mxu0 0
        %1009 = vmatpush1.bf16.xpose.msra.mxu0 0
        %1010 = vmatprep.mubr.bf16.mxu0 0
        %1011 = vmatmul.mubr.bf16.gmra.mrb[0].mxu0 %v973
        %v1012 = vpop.f32.mrb[0].mxu0
        %v1013 = vadd.f32 %v486, %v1012
        %v1014 = vpop.f32.mrb[0].mxu0
        %v1015 = vpop.f32.mrb[0].mxu0
        %v1016 = vpop.f32.mrb[0].mxu0
        %1017 = vdwg.mxu0
        %vm1018 = vcmask 64512
        %v1019 = vsel %vm1018, %v967, -inf
        %1020 = vmax.xlane.f32.xlu0 %v1019
        %v1021 = vpop.xlane.xlu0 %1020
        %v1022 = vsel %vm1018, %v1013, -inf
        %1023 = vmax.xlane.f32.xlu0 %v1022
        %v1024 = vpop.xlane.xlu0 %1023
        %v1025 = vsub.f32 %v967, %v1021
        %v1026 = vsub.f32 %v1013, %v1024
        %v1027 = vmul.f32 %v1025, 1.442695
        %v1028 = vpow.pop %v1027
        %v1029 = vmul.f32 %v1026, 1.442695
        %v1030 = vpow.pop %v1029
        %v1031 = vsel %vm1018, %v1028, 0.0
        %1032 = vadd.xlane.f32.xlu0 %v1031
        %v1033 = vpop.xlane.xlu0 %1032
        %v1034 = vsel %vm1018, %v1030, 0.0
        %1035 = vadd.xlane.f32.xlu0 %v1034
        %v1036 = vpop.xlane.xlu0 %1035
        %v1037 = vrcp.pop %v1033
        %v1038 = vrcp.pop %v1036
        %v1039 = vmul.f32 %v1028, %v1037
        %v1040 = vmul.f32 %v1030, %v1038
        %v1041 = vpack.c.bf16 %v1039, %v1039
        %v1042 = vpack.c.bf16 %v1040, %v1040
        %v1044 = vsel %vm1018, %v1041, 0
        %vm1046 = vcmask 1043456
        %v1048 = vsel %vm1046, %v923, 0
        %1050 = vmatprep.subr.bf16.mxu0 0
        %1051 = vmatpush1.bf16.msra.mxu0 %v1048
        %1052 = vmatprep.subr.bf16.mxu0 0
        %1053 = vmatpush1.bf16.msra.mxu0 0
        %1054 = vmatprep.subr.bf16.mxu0 0
        %1055 = vmatpush1.bf16.msra.mxu0 0
        %1056 = vmatprep.subr.bf16.mxu0 0
        %1057 = vmatpush1.bf16.msra.mxu0 0
        %1058 = vmatprep.subr.bf16.mxu0 0
        %1059 = vmatpush1.bf16.msra.mxu0 0
        %1060 = vmatprep.subr.bf16.mxu0 0
        %1061 = vmatpush1.bf16.msra.mxu0 0
        %1062 = vmatprep.subr.bf16.mxu0 0
        %1063 = vmatpush1.bf16.msra.mxu0 0
        %1064 = vmatprep.subr.bf16.mxu0 0
        %1065 = vmatpush1.bf16.msra.mxu0 0
        %1066 = vmatprep.subr.bf16.mxu0 0
        %1067 = vmatpush1.bf16.msra.mxu0 0
        %1068 = vmatprep.subr.bf16.mxu0 0
        %1069 = vmatpush1.bf16.msra.mxu0 0
        %1070 = vmatprep.subr.bf16.mxu0 0
        %1071 = vmatpush1.bf16.msra.mxu0 0
        %1072 = vmatprep.subr.bf16.mxu0 0
        %1073 = vmatpush1.bf16.msra.mxu0 0
        %1074 = vmatprep.subr.bf16.mxu0 0
        %1075 = vmatpush1.bf16.msra.mxu0 0
        %1076 = vmatprep.subr.bf16.mxu0 0
        %1077 = vmatpush1.bf16.msra.mxu0 0
        %1078 = vmatprep.subr.bf16.mxu0 0
        %1079 = vmatpush1.bf16.msra.mxu0 0
        %1080 = vmatprep.subr.bf16.mxu0 0
        %1081 = vmatpush1.bf16.msra.mxu0 0
        %1082 = vmatprep.mubr.bf16.mxu0 0
        %1083 = vmatmul.mubr.bf16.gmra.mrb[0].mxu0 %v1044
        %v1084 = vpop.f32.mrb[0].mxu0
        %v1085 = vadd.f32 0.0, %v1084
        %v1086 = vpop.f32.mrb[0].mxu0
        %v1087 = vpop.f32.mrb[0].mxu0
        %v1088 = vpop.f32.mrb[0].mxu0
        %1089 = vdwg.mxu0
        %v1091 = vsel %vm1018, %v1042, 0
        %v1094 = vsel %vm1046, %v924, 0
        %1096 = vmatprep.subr.bf16.mxu0 0
        %1097 = vmatpush1.bf16.msra.mxu0 %v1094
        %1098 = vmatprep.subr.bf16.mxu0 0
        %1099 = vmatpush1.bf16.msra.mxu0 0
        %1100 = vmatprep.subr.bf16.mxu0 0
        %1101 = vmatpush1.bf16.msra.mxu0 0
        %1102 = vmatprep.subr.bf16.mxu0 0
        %1103 = vmatpush1.bf16.msra.mxu0 0
        %1104 = vmatprep.subr.bf16.mxu0 0
        %1105 = vmatpush1.bf16.msra.mxu0 0
        %1106 = vmatprep.subr.bf16.mxu0 0
        %1107 = vmatpush1.bf16.msra.mxu0 0
        %1108 = vmatprep.subr.bf16.mxu0 0
        %1109 = vmatpush1.bf16.msra.mxu0 0
        %1110 = vmatprep.subr.bf16.mxu0 0
        %1111 = vmatpush1.bf16.msra.mxu0 0
        %1112 = vmatprep.subr.bf16.mxu0 0
        %1113 = vmatpush1.bf16.msra.mxu0 0
        %1114 = vmatprep.subr.bf16.mxu0 0
        %1115 = vmatpush1.bf16.msra.mxu0 0
        %1116 = vmatprep.subr.bf16.mxu0 0
        %1117 = vmatpush1.bf16.msra.mxu0 0
        %1118 = vmatprep.subr.bf16.mxu0 0
        %1119 = vmatpush1.bf16.msra.mxu0 0
        %1120 = vmatprep.subr.bf16.mxu0 0
        %1121 = vmatpush1.bf16.msra.mxu0 0
        %1122 = vmatprep.subr.bf16.mxu0 0
        %1123 = vmatpush1.bf16.msra.mxu0 0
        %1124 = vmatprep.subr.bf16.mxu0 0
        %1125 = vmatpush1.bf16.msra.mxu0 0
        %1126 = vmatprep.subr.bf16.mxu0 0
        %1127 = vmatpush1.bf16.msra.mxu0 0
        %1128 = vmatprep.mubr.bf16.mxu0 0
        %1129 = vmatmul.mubr.bf16.gmra.mrb[0].mxu0 %v1091
        %v1130 = vpop.f32.mrb[0].mxu0
        %v1131 = vadd.f32 0.0, %v1130
        %v1132 = vpop.f32.mrb[0].mxu0
        %v1133 = vpop.f32.mrb[0].mxu0
        %v1134 = vpop.f32.mrb[0].mxu0
        %1135 = vdwg.mxu0
        %v1136 = vcombine.high %v1085, 0.0
        %v1138 = vunpack.c.l.s4 1983009808
        %v1139 = vunpack.c.0.s8 %v1138
        %v1140 = vlaneseq
        %v1141 = vshrl.u32 %v1140, 7
        %v1142 = vsub.s32 %v1139, %v1141
        %v1143 = vrot.slane %v1085, %v1142
        %v1145 = vunpack.c.l.s4 1983009808
        %v1146 = vunpack.c.0.s8 %v1145
        %v1147 = vlaneseq
        %v1148 = vshrl.u32 %v1147, 7
        %v1149 = vsub.s32 %v1146, %v1148
        %v1150 = vrot.slane %v1136, %v1149
        %v1151 = vcombine.high %v1131, 0.0
        %v1153 = vunpack.c.l.s4 1983009808
        %v1154 = vunpack.c.0.s8 %v1153
        %v1155 = vlaneseq
        %v1156 = vshrl.u32 %v1155, 7
        %v1157 = vsub.s32 %v1154, %v1156
        %v1158 = vrot.slane %v1131, %v1157
        %v1160 = vunpack.c.l.s4 1983009808
        %v1161 = vunpack.c.0.s8 %v1160
        %v1162 = vlaneseq
        %v1163 = vshrl.u32 %v1162, 7
        %v1164 = vsub.s32 %v1161, %v1163
        %v1165 = vrot.slane %v1151, %v1164
        %v1166 = vcombine.low %v1143, %v1158
        %v1167 = vcombine.high %v1143, %v1158
        %v1169 = vunpack.c.l.s4 1934713408
        %v1170 = vunpack.c.0.s8 %v1169
        %v1171 = vlaneseq
        %v1172 = vshrl.u32 %v1171, 7
        %v1173 = vsub.s32 %v1170, %v1172
        %v1174 = vrot.slane %v1166, %v1173
        %v1176 = vunpack.c.l.s4 1934713408
        %v1177 = vunpack.c.0.s8 %v1176
        %v1178 = vlaneseq
        %v1179 = vshrl.u32 %v1178, 7
        %v1180 = vsub.s32 %v1177, %v1179
        %v1181 = vrot.slane %v1167, %v1180
        %v1182 = vcombine.low %v1150, %v1165
        %v1183 = vcombine.high %v1150, %v1165
        %v1185 = vunpack.c.l.s4 1934713408
        %v1186 = vunpack.c.0.s8 %v1185
        %v1187 = vlaneseq
        %v1188 = vshrl.u32 %v1187, 7
        %v1189 = vsub.s32 %v1186, %v1188
        %v1190 = vrot.slane %v1182, %v1189
        %v1192 = vunpack.c.l.s4 1934713408
        %v1193 = vunpack.c.0.s8 %v1192
        %v1194 = vlaneseq
        %v1195 = vshrl.u32 %v1194, 7
        %v1196 = vsub.s32 %v1193, %v1195
        %v1197 = vrot.slane %v1183, %v1196
        %v1198 = vcombine.high %v1174, 0.0
        %v1199 = vcombine.high %v1181, 0.0
        %v1200 = vcombine.high %v1190, 0.0
        %v1201 = vcombine.high %v1197, 0.0
        %v1202 = vcombine.low %v1174, %v1181
        %v1204 = vunpack.c.l.s4 1983009808
        %v1205 = vunpack.c.0.s8 %v1204
        %v1206 = vlaneseq
        %v1207 = vshrl.u32 %v1206, 7
        %v1208 = vsub.s32 %v1205, %v1207
        %v1209 = vrot.slane %v1202, %v1208
        %v1210 = vcombine.low %v1198, %v1199
        %v1212 = vunpack.c.l.s4 1983009808
        %v1213 = vunpack.c.0.s8 %v1212
        %v1214 = vlaneseq
        %v1215 = vshrl.u32 %v1214, 7
        %v1216 = vsub.s32 %v1213, %v1215
        %v1217 = vrot.slane %v1210, %v1216
        %v1218 = vcombine.low %v1190, %v1197
        %v1220 = vunpack.c.l.s4 1983009808
        %v1221 = vunpack.c.0.s8 %v1220
        %v1222 = vlaneseq
        %v1223 = vshrl.u32 %v1222, 7
        %v1224 = vsub.s32 %v1221, %v1223
        %v1225 = vrot.slane %v1218, %v1224
        %v1226 = vcombine.low %v1200, %v1201
        %v1228 = vunpack.c.l.s4 1983009808
        %v1229 = vunpack.c.0.s8 %v1228
        %v1230 = vlaneseq
        %v1231 = vshrl.u32 %v1230, 7
        %v1232 = vsub.s32 %v1229, %v1231
        %v1233 = vrot.slane %v1226, %v1232
        %v1234 = vcombine.low %v1209, %v1217
        %v1236 = vunpack.c.l.s4 1934713408
        %v1237 = vunpack.c.0.s8 %v1236
        %v1238 = vlaneseq
        %v1239 = vshrl.u32 %v1238, 7
        %v1240 = vsub.s32 %v1237, %v1239
        %v1241 = vrot.slane %v1234, %v1240
        %v1242 = vcombine.low %v1225, %v1233
        %v1244 = vunpack.c.l.s4 1934713408
        %v1245 = vunpack.c.0.s8 %v1244
        %v1246 = vlaneseq
        %v1247 = vshrl.u32 %v1246, 7
        %v1248 = vsub.s32 %v1245, %v1247
        %v1249 = vrot.slane %v1242, %v1248
        %v1250 = vcombine.low %v1241, %v1249
        %v1251 = vcombine.high %v1241, %v1249
        %1253 = vrot.lane.b32.xlu0 %v1251, 16
        %v1254 = vpop.permute.xlu0 %1253
        %v1256 = vsel %vm925, %v1250, %v1254
        %v1257 = vpack.c.bf16 %v1256, %v1256
        %v1258 = vld [vmem:[%s4] sm:$0xf]
        %v1259 = vld [vmem:[%s4 + $0x4] sm:$0xf]
        %v1260 = vld [vmem:[%s4 + $0x8] sm:$0xf]
        %v1261 = vld [vmem:[%s4 + $0xc] sm:$0xf]
        %v1262 = vld [vmem:[%s5] sm:$0x1]
        %v1264 = vlaneseq
        %v1265 = vshrl.u32 %v1264, 7
        %v1266 = vsub.s32 0, %v1265
        %v1267 = vrot.slane %v1262, %v1266
        %v1273 = vunpack.c.l.b16 %v1258
        %v1274 = vunpack.c.l.b16 %v1259
        %v1275 = vunpack.c.l.b16 %v1260
        %v1276 = vunpack.c.l.b16 %v1261
        %v1277 = vpack.c.b16 %v1274, %v1273
        %v1278 = vpack.c.b16 %v1276, %v1275
        %v1282 = vsel %vm511, %v1257, 0
        %1284 = vmatprep.subr.bf16.mxu0 0
        %1285 = vmatpush1.bf16.msra.mxu0 %v1277
        %1286 = vmatprep.subr.bf16.mxu0 0
        %1287 = vmatpush1.bf16.msra.mxu0 %v1278
        %1288 = vmatprep.subr.bf16.mxu0 0
        %1289 = vmatpush1.bf16.msra.mxu0 0
        %1290 = vmatprep.subr.bf16.mxu0 0
        %1291 = vmatpush1.bf16.msra.mxu0 0
        %1292 = vmatprep.subr.bf16.mxu0 0
        %1293 = vmatpush1.bf16.msra.mxu0 0
        %1294 = vmatprep.subr.bf16.mxu0 0
        %1295 = vmatpush1.bf16.msra.mxu0 0
        %1296 = vmatprep.subr.bf16.mxu0 0
        %1297 = vmatpush1.bf16.msra.mxu0 0
        %1298 = vmatprep.subr.bf16.mxu0 0
        %1299 = vmatpush1.bf16.msra.mxu0 0
        %1300 = vmatprep.subr.bf16.mxu0 0
        %1301 = vmatpush1.bf16.msra.mxu0 0
        %1302 = vmatprep.subr.bf16.mxu0 0
        %1303 = vmatpush1.bf16.msra.mxu0 0
        %1304 = vmatprep.subr.bf16.mxu0 0
        %1305 = vmatpush1.bf16.msra.mxu0 0
        %1306 = vmatprep.subr.bf16.mxu0 0
        %1307 = vmatpush1.bf16.msra.mxu0 0
        %1308 = vmatprep.subr.bf16.mxu0 0
        %1309 = vmatpush1.bf16.msra.mxu0 0
        %1310 = vmatprep.subr.bf16.mxu0 0
        %1311 = vmatpush1.bf16.msra.mxu0 0
        %1312 = vmatprep.subr.bf16.mxu0 0
        %1313 = vmatpush1.bf16.msra.mxu0 0
        %1314 = vmatprep.subr.bf16.mxu0 0
        %1315 = vmatpush1.bf16.msra.mxu0 0
        %1316 = vmatprep.mubr.bf16.mxu0 0
        %1317 = vmatmul.mubr.bf16.gmra.mrb[0].mxu0 %v1282
        %v1318 = vpop.f32.mrb[0].mxu0
        %v1319 = vadd.f32 %v1267, %v1318
        %v1320 = vpop.f32.mrb[0].mxu0
        %v1321 = vpop.f32.mrb[0].mxu0
        %v1322 = vpop.f32.mrb[0].mxu0
        %1323 = vdwg.mxu0
        %v1324 = vadd.f32 %v1319, %v485
        %v1325 = vld [vmem:[%s6] sm:$0x1]
        %v1326 = vld [vmem:[%s7] sm:$0x1]
        %v1327 = vsel %vm511, %v1324, 0.0
        %1328 = vadd.xlane.f32.xlu0 %v1327
        %v1329 = vpop.xlane.xlu0 %1328
        %v1330 = vrcp.pop 32.0
        %v1331 = vmul.f32 %v1329, %v1330
        %v1332 = vsub.f32 %v1324, %v1331
        %v1333 = vmul.f32 %v1332, %v1332
        %v1334 = vsel %vm511, %v1333, 0.0
        %1335 = vadd.xlane.f32.xlu0 %v1334
        %v1336 = vpop.xlane.xlu0 %1335
        %v1337 = vmul.f32 %v1336, %v1330
        %v1338 = vadd.f32 %v1337, 1e-12
        %v1339 = vrsqrt.pop %v1338
        %v1340 = vmul.f32 %v1338, %v1339
        %vm1341 = vcmp.eq.f32.partialorder %v1338, inf
        %v1342 = vsel %vm1341, %v1338, %v1340
        %vm1343 = vcmp.eq.f32.partialorder %v1338, 0.0
        %v1344 = vand.u32 %v1338, 2147483648
        %v1345 = vsel %vm1343, %v1344, %v1342
        %v1346 = vrcp.pop %v1345
        %v1347 = vmul.f32 %v1332, %v1346
        %v1349 = vlaneseq
        %v1350 = vshrl.u32 %v1349, 7
        %v1351 = vsub.s32 0, %v1350
        %v1352 = vrot.slane %v1325, %v1351
        %v1354 = vmul.f32 %v1352, %v1347
        %v1356 = vlaneseq
        %v1357 = vshrl.u32 %v1356, 7
        %v1358 = vsub.s32 0, %v1357
        %v1359 = vrot.slane %v1326, %v1358
        %v1361 = vadd.f32 %v1354, %v1359
        %v1362 = vpack.c.bf16 %v1361, %v1361
        %v1363 = vld [vmem:[%s8] sm:$0xf]
        %v1364 = vld [vmem:[%s8 + $0x4] sm:$0xf]
        %v1365 = vld [vmem:[%s8 + $0x8] sm:$0xf]
        %v1366 = vld [vmem:[%s8 + $0xc] sm:$0xf]
        %v1367 = vld [vmem:[%s9] sm:$0x1]
        %v1369 = vlaneseq
        %v1370 = vshrl.u32 %v1369, 7
        %v1371 = vsub.s32 0, %v1370
        %v1372 = vrot.slane %v1367, %v1371
        %v1378 = vunpack.c.l.b16 %v1363
        %v1379 = vunpack.c.l.b16 %v1364
        %v1380 = vunpack.c.l.b16 %v1365
        %v1381 = vunpack.c.l.b16 %v1366
        %v1382 = vpack.c.b16 %v1379, %v1378
        %v1383 = vpack.c.b16 %v1381, %v1380
        %v1387 = vsel %vm511, %v1362, 0
        %1389 = vmatprep.subr.bf16.mxu0 0
        %1390 = vmatpush1.bf16.msra.mxu0 %v1382
        %1391 = vmatprep.subr.bf16.mxu0 0
        %1392 = vmatpush1.bf16.msra.mxu0 %v1383
        %1393 = vmatprep.subr.bf16.mxu0 0
        %1394 = vmatpush1.bf16.msra.mxu0 0
        %1395 = vmatprep.subr.bf16.mxu0 0
        %1396 = vmatpush1.bf16.msra.mxu0 0
        %1397 = vmatprep.subr.bf16.mxu0 0
        %1398 = vmatpush1.bf16.msra.mxu0 0
        %1399 = vmatprep.subr.bf16.mxu0 0
        %1400 = vmatpush1.bf16.msra.mxu0 0
        %1401 = vmatprep.subr.bf16.mxu0 0
        %1402 = vmatpush1.bf16.msra.mxu0 0
        %1403 = vmatprep.subr.bf16.mxu0 0
        %1404 = vmatpush1.bf16.msra.mxu0 0
        %1405 = vmatprep.subr.bf16.mxu0 0
        %1406 = vmatpush1.bf16.msra.mxu0 0
        %1407 = vmatprep.subr.bf16.mxu0 0
        %1408 = vmatpush1.bf16.msra.mxu0 0
        %1409 = vmatprep.subr.bf16.mxu0 0
        %1410 = vmatpush1.bf16.msra.mxu0 0
        %1411 = vmatprep.subr.bf16.mxu0 0
        %1412 = vmatpush1.bf16.msra.mxu0 0
        %1413 = vmatprep.subr.bf16.mxu0 0
        %1414 = vmatpush1.bf16.msra.mxu0 0
        %1415 = vmatprep.subr.bf16.mxu0 0
        %1416 = vmatpush1.bf16.msra.mxu0 0
        %1417 = vmatprep.subr.bf16.mxu0 0
        %1418 = vmatpush1.bf16.msra.mxu0 0
        %1419 = vmatprep.subr.bf16.mxu0 0
        %1420 = vmatpush1.bf16.msra.mxu0 0
        %1421 = vmatprep.mubr.bf16.mxu0 0
        %1422 = vmatmul.mubr.bf16.gmra.mrb[0].mxu0 %v1387
        %v1423 = vpop.f32.mrb[0].mxu0
        %v1424 = vadd.f32 %v1372, %v1423
        %v1425 = vpop.f32.mrb[0].mxu0
        %v1426 = vpop.f32.mrb[0].mxu0
        %v1427 = vpop.f32.mrb[0].mxu0
        %1428 = vdwg.mxu0
        %v1429 = vmul.f32 %v1424, 0.5
        %v1430 = vrcp.pop 1.4142135
        %v1431 = vmul.f32 %v1424, %v1430
        %v1432 = verf.f32.pop %v1431
        %v1433 = vadd.f32 %v1432, 1.0
        %v1434 = vmul.f32 %v1429, %v1433
        %v1435 = vpack.c.bf16 %v1434, %v1434
        %v1436 = vld [vmem:[%s10] sm:$0xf]
        %v1437 = vld [vmem:[%s10 + $0x4] sm:$0xf]
        %v1438 = vld [vmem:[%s10 + $0x8] sm:$0xf]
        %v1439 = vld [vmem:[%s10 + $0xc] sm:$0xf]
        %v1440 = vld [vmem:[%s10 + $0x10] sm:$0xf]
        %v1441 = vld [vmem:[%s10 + $0x14] sm:$0xf]
        %v1442 = vld [vmem:[%s10 + $0x18] sm:$0xf]
        %v1443 = vld [vmem:[%s10 + $0x1c] sm:$0xf]
        %v1444 = vld [vmem:[%s10 + $0x20] sm:$0xf]
        %v1445 = vld [vmem:[%s10 + $0x24] sm:$0xf]
        %v1446 = vld [vmem:[%s10 + $0x28] sm:$0xf]
        %v1447 = vld [vmem:[%s10 + $0x2c] sm:$0xf]
        %v1448 = vld [vmem:[%s10 + $0x30] sm:$0xf]
        %v1449 = vld [vmem:[%s10 + $0x34] sm:$0xf]
        %v1450 = vld [vmem:[%s10 + $0x38] sm:$0xf]
        %v1451 = vld [vmem:[%s10 + $0x3c] sm:$0xf]
        %v1452 = vld [vmem:[%s11] sm:$0x1]
        %v1454 = vlaneseq
        %v1455 = vshrl.u32 %v1454, 7
        %v1456 = vsub.s32 0, %v1455
        %v1457 = vrot.slane %v1452, %v1456
        %v1475 = vunpack.c.l.b16 %v1436
        %v1476 = vunpack.c.l.b16 %v1437
        %v1477 = vunpack.c.l.b16 %v1438
        %v1478 = vunpack.c.l.b16 %v1439
        %v1479 = vunpack.c.l.b16 %v1440
        %v1480 = vunpack.c.l.b16 %v1441
        %v1481 = vunpack.c.l.b16 %v1442
        %v1482 = vunpack.c.l.b16 %v1443
        %v1483 = vunpack.c.l.b16 %v1444
        %v1484 = vunpack.c.l.b16 %v1445
        %v1485 = vunpack.c.l.b16 %v1446
        %v1486 = vunpack.c.l.b16 %v1447
        %v1487 = vunpack.c.l.b16 %v1448
        %v1488 = vunpack.c.l.b16 %v1449
        %v1489 = vunpack.c.l.b16 %v1450
        %v1490 = vunpack.c.l.b16 %v1451
        %v1491 = vpack.c.b16 %v1476, %v1475
        %v1492 = vpack.c.b16 %v1478, %v1477
        %v1493 = vpack.c.b16 %v1480, %v1479
        %v1494 = vpack.c.b16 %v1482, %v1481
        %v1495 = vpack.c.b16 %v1484, %v1483
        %v1496 = vpack.c.b16 %v1486, %v1485
        %v1497 = vpack.c.b16 %v1488, %v1487
        %v1498 = vpack.c.b16 %v1490, %v1489
        %1507 = vmatprep.subr.bf16.mxu0 0
        %1508 = vmatpush1.bf16.msra.mxu0 %v1491
        %1509 = vmatprep.subr.bf16.mxu0 0
        %1510 = vmatpush1.bf16.msra.mxu0 %v1492
        %1511 = vmatprep.subr.bf16.mxu0 0
        %1512 = vmatpush1.bf16.msra.mxu0 %v1493
        %1513 = vmatprep.subr.bf16.mxu0 0
        %1514 = vmatpush1.bf16.msra.mxu0 %v1494
        %1515 = vmatprep.subr.bf16.mxu0 0
        %1516 = vmatpush1.bf16.msra.mxu0 %v1495
        %1517 = vmatprep.subr.bf16.mxu0 0
        %1518 = vmatpush1.bf16.msra.mxu0 %v1496
        %1519 = vmatprep.subr.bf16.mxu0 0
        %1520 = vmatpush1.bf16.msra.mxu0 %v1497
        %1521 = vmatprep.subr.bf16.mxu0 0
        %1522 = vmatpush1.bf16.msra.mxu0 %v1498
        %1523 = vmatprep.subr.bf16.mxu0 0
        %1524 = vmatpush1.bf16.msra.mxu0 0
        %1525 = vmatprep.subr.bf16.mxu0 0
        %1526 = vmatpush1.bf16.msra.mxu0 0
        %1527 = vmatprep.subr.bf16.mxu0 0
        %1528 = vmatpush1.bf16.msra.mxu0 0
        %1529 = vmatprep.subr.bf16.mxu0 0
        %1530 = vmatpush1.bf16.msra.mxu0 0
        %1531 = vmatprep.subr.bf16.mxu0 0
        %1532 = vmatpush1.bf16.msra.mxu0 0
        %1533 = vmatprep.subr.bf16.mxu0 0
        %1534 = vmatpush1.bf16.msra.mxu0 0
        %1535 = vmatprep.subr.bf16.mxu0 0
        %1536 = vmatpush1.bf16.msra.mxu0 0
        %1537 = vmatprep.subr.bf16.mxu0 0
        %1538 = vmatpush1.bf16.msra.mxu0 0
        %1539 = vmatprep.mubr.bf16.mxu0 0
        %1540 = vmatmul.mubr.bf16.gmra.mrb[0].mxu0 %v1435
        %v1541 = vpop.f32.mrb[0].mxu0
        %v1542 = vadd.f32 %v1457, %v1541
        %v1543 = vpop.f32.mrb[0].mxu0
        %v1544 = vpop.f32.mrb[0].mxu0
        %v1545 = vpop.f32.mrb[0].mxu0
        %1546 = vdwg.mxu0
        %v1547 = vadd.f32 %v1542, %v1361
        %v1548 = vld [vmem:[%s12] sm:$0x1]
        %v1549 = vld [vmem:[%s13] sm:$0x1]
        %v1550 = vsel %vm511, %v1547, 0.0
        %1551 = vadd.xlane.f32.xlu0 %v1550
        %v1552 = vpop.xlane.xlu0 %1551
        %v1553 = vmul.f32 %v1552, %v1330
        %v1554 = vsub.f32 %v1547, %v1553
        %v1555 = vmul.f32 %v1554, %v1554
        %v1556 = vsel %vm511, %v1555, 0.0
        %1557 = vadd.xlane.f32.xlu0 %v1556
        %v1558 = vpop.xlane.xlu0 %1557
        %v1559 = vmul.f32 %v1558, %v1330
        %v1560 = vadd.f32 %v1559, 1e-12
        %v1561 = vrsqrt.pop %v1560
        %v1562 = vmul.f32 %v1560, %v1561
        %vm1563 = vcmp.eq.f32.partialorder %v1560, inf
        %v1564 = vsel %vm1563, %v1560, %v1562
        %vm1565 = vcmp.eq.f32.partialorder %v1560, 0.0
        %v1566 = vand.u32 %v1560, 2147483648
        %v1567 = vsel %vm1565, %v1566, %v1564
        %v1568 = vrcp.pop %v1567
        %v1569 = vmul.f32 %v1554, %v1568
        %v1571 = vlaneseq
        %v1572 = vshrl.u32 %v1571, 7
        %v1573 = vsub.s32 0, %v1572
        %v1574 = vrot.slane %v1548, %v1573
        %v1576 = vmul.f32 %v1574, %v1569
        %v1578 = vlaneseq
        %v1579 = vshrl.u32 %v1578, 7
        %v1580 = vsub.s32 0, %v1579
        %v1581 = vrot.slane %v1549, %v1580
        %v1583 = vadd.f32 %v1576, %v1581
        %1584 = vst.msk [vmem:[#allocation2] sm:$0xff] %vm511, %v1583
        %1585 = vst.msk [vmem:[%s472] sm:$0xff] %vm511, %v1583
        %s1586 = sand.u32 %s349, 1
        %s1587 = scalar_lea.sflag [#allocation4], %s1586
        %s1588 = sand.u32 %s349, 1
        %s1589 = smul.addr %s1588, 8
        %s1590 = scalar_lea.vmem [#allocation3], %s1589
        // Predicated region
        $region81: #{tpu_custom_call.1} parent=75 // pred_check
          %p1591 = pneg %p359
        $region82: #{tpu_custom_call.1} parent=75 // pred_check_branch
          %1593 = sbr.rel (%p1591) target = $region84
        $region83: #{tpu_custom_call.1} parent=75 // pred_region
          %s1595 = ssub.s32 128, 128
          %1596 = vsyncadd %s1587, %s1595
          %s1597 = smul.addr %s33, 2
          %s1598 = sadd.s32 %s32, %s1597
          %s1599 = smul.addr %s1598, 128
          %s1600 = scalar_lea.hbm %s14, %s1599
          %s1602 = sshll.u32 %s1590, 4
          %s1603 = int_to_ptr.vmem [resolvable:$true] %s1602
          %1605 = dma.vmem_to_hbm [thread:$0]  %s1603, 128, %s1600, %s1587
        $region84: #{tpu_custom_call.1} parent=75 // pred_fallthru
          _
      $region76: #{tpu_custom_call.1} parent=5 // pred_fallthru
        _
      %p1606 = scmp.le.s32.totalorder 2, %s23
      // Predicated region
      $region85: #{tpu_custom_call.1} parent=5 // pred_check
        %p1607 = pneg %p1606
      $region86: #{tpu_custom_call.1} parent=5 // pred_check_branch
        %1609 = sbr.rel (%p1607) target = $region88
      $region87: #{tpu_custom_call.1} parent=5 // pred_region
        %s1610 = ssub.s32 %s23, 2
        // Predicated region
        $region89: #{tpu_custom_call.1} parent=87 // pred_check
          %p1611 = pneg %p365
        $region90: #{tpu_custom_call.1} parent=87 // pred_check_branch
          %1613 = sbr.rel (%p1611) target = $region92
        $region91: #{tpu_custom_call.1} parent=87 // pred_region
          %s1614 = sand.u32 %s350, 1
          %s1615 = scalar_lea.sflag [#allocation4], %s1614
          %s1616 = sand.u32 %s350, 1
          %s1617 = smul.addr %s1616, 8
          %s1618 = scalar_lea.vmem [#allocation3], %s1617
          %1619 = dma.done %s1615, 128
        $region92: #{tpu_custom_call.1} parent=87 // pred_fallthru
          _
      $region88: #{tpu_custom_call.1} parent=5 // pred_fallthru
        _
    $region6: #{tpu_custom_call.1} parent=1 // loop_footer
      %s27 = sadd.s32 1, %s23
    $region7: #{tpu_custom_call.1} parent=1 // loop_footer_branch
      %22 = sbr.rel target = $region3
    $region8: #{tpu_custom_call.1} parent=1 // loop_exit
      _
    %1620 = vsyncpa [#allocation4], 1
    %s1621 = scalar_lea.sflag [#allocation4], 1
    %1622 = vsyncpa %s1621, 1

</llo_original>
